<compile_context>
chip_gen: v7x
topology: tpu7x:2x2x1
jax: 0.10.0
libtpu: 0.0.40
codegen_flags: <defaults>
</compile_context>

<pallas_src>
import functools

import jax
import jax.numpy as jnp
from jax import lax
from jax.experimental import pallas as pl
from jax.experimental.pallas import tpu as pltpu

_EPS = 1e-8
_LANE = 128


def _round_up(x, m):
    return ((x + m - 1) // m) * m


def _fused_prop_kernel(feat_in_ref, adj_ref, w_ref, b_ref, out_ref,
                       feat_ref, keep_ori_ref, *,
                       keep_ratio, half_inv_temp, n_heads, n_hops):
    hop = pl.program_id(0)

    # First hop: initialize the hop-carried feature state and keep_ratio*ori.
    @pl.when(hop == 0)
    def _():
        f0 = feat_in_ref[...].astype(jnp.float32)
        feat_ref[...] = f0
        keep_ori_ref[...] = keep_ratio * f0

    feat = feat_ref[...]                          # (Np, Dp) f32 hop-carried state
    feat_bf = feat.astype(jnp.bfloat16)           # cast once per hop, shared RHS
    adj = adj_ref[...]                            # (Np, Np) bf16 binary mask

    # Accumulate the row-stochastic P over heads; one propagation matmul per hop.
    p_sum = None
    for j in range(n_heads):                      # unrolled: n_heads small & static
        # Per-head projection (f32 MXU; zero-padded lanes stay exactly zero).
        h = jnp.dot(feat, w_ref[j], preferred_element_type=jnp.float32) + b_ref[j]

        # Row L2-normalize; fold 0.5/temp into one cosine operand so
        #   sigmoid(cos/temp) == 0.5 + 0.5*tanh(cos/(2*temp))   (single EUP op).
        inv_norm = lax.rsqrt(jnp.sum(h * h, axis=-1, keepdims=True) + _EPS)
        hn = h * inv_norm
        hn_a = (hn * half_inv_temp).astype(jnp.bfloat16)
        hn_b = hn.astype(jnp.bfloat16)

        # A @ B^T without materializing a transpose (contract last dims).
        # TODO(synk): if the bundle dump shows a latent vxpose here, transpose
        # hn_b explicitly once and reuse it across the N^2 path.
        cos_t = lax.dot_general(
            hn_a, hn_b, dimension_numbers=(((1,), (1,)), ((), ())),
            preferred_element_type=jnp.float32)                   # (Np, Np)

        sig = 0.5 + 0.5 * jnp.tanh(cos_t)
        sim = sig * adj                 # bf16 mask promoted per-use, no f32 copy
        denom = jnp.sum(sim, axis=-1, keepdims=True) + _EPS
        p = sim * pl.reciprocal(denom, approx=True)               # row-normalized
        p_sum = p if p_sum is None else p_sum + p

    # Single propagation matmul per hop (bf16 operands, f32 accumulation), then
    # the residual mix / head mean, updating the VMEM carry.
    prop = jnp.dot(p_sum.astype(jnp.bfloat16), feat_bf,
                   preferred_element_type=jnp.float32)            # (Np, Dp)
    new_feat = keep_ori_ref[...] + ((1.0 - keep_ratio) / n_heads) * prop
    feat_ref[...] = new_feat

    # Only the final hop needs to touch the (resident) output block.
    @pl.when(hop == n_hops - 1)
    def _():
        out_ref[...] = new_feat.astype(out_ref.dtype)


def multihead_cosine_propagation_forward(features, adj_stack, weights, biases,
                                         *, keep_ratio, temp):
    """Fused forward.

    features:  (N, D) f32
    adj_stack: (n_hops, N, N)            (n_hops = n_hop * 2)
    weights:   (n_hops, n_heads, D, hid) f32
    biases:    (n_hops, n_heads, 1, hid) f32
    """
    n, d = features.shape
    n_hops, n_heads, _, hid = weights.shape

    # Lane-dense padding: feature / hidden channel dims AND the node dim
    # (all (N,N) intermediates put N on the lane axis).
    dp = _round_up(d, _LANE)
    hp = _round_up(hid, _LANE)
    np_ = _round_up(n, _LANE)

    feat_p = jnp.pad(features.astype(jnp.float32),
                     ((0, np_ - n), (0, dp - d)))
    # Zero-padded adjacency rows/cols: pad nodes never leak into real rows'
    # denominators; pad rows normalize against eps to 0 and are sliced off.
    adj_p = jnp.pad(adj_stack.astype(jnp.float32),
                    ((0, 0), (0, np_ - n), (0, np_ - n))).astype(jnp.bfloat16)
    w_p = jnp.pad(weights.astype(jnp.float32),
                  ((0, 0), (0, 0), (0, dp - d), (0, hp - hid)))
    b_p = jnp.pad(biases.astype(jnp.float32),
                  ((0, 0), (0, 0), (0, 0), (0, hp - hid)))

    kernel = functools.partial(
        _fused_prop_kernel,
        keep_ratio=float(keep_ratio),
        half_inv_temp=float(0.5 / temp),
        n_heads=n_heads,
        n_hops=n_hops)

    out = pl.pallas_call(
        kernel,
        out_shape=jax.ShapeDtypeStruct((np_, dp), jnp.float32),
        grid_spec=pltpu.PrefetchScalarGridSpec(
            num_scalar_prefetch=0,
            grid=(n_hops,),                                        # hops only
            in_specs=[
                pl.BlockSpec((np_, dp), lambda i: (0, 0)),         # ori features (resident)
                pl.BlockSpec((None, np_, np_), lambda i: (i, 0, 0)),          # adj per hop
                pl.BlockSpec((None, n_heads, dp, hp), lambda i: (i, 0, 0, 0)),  # W, all heads of hop
                pl.BlockSpec((None, n_heads, 1, hp), lambda i: (i, 0, 0, 0)),   # b, all heads of hop
            ],
            out_specs=pl.BlockSpec((np_, dp), lambda i: (0, 0)),   # resident output
            scratch_shapes=[
                pltpu.VMEM((np_, dp), jnp.float32),   # hop-carried features
                pltpu.VMEM((np_, dp), jnp.float32),   # keep_ratio * ori
            ],
        ),
        # The hop axis carries state (feature chain) -> arbitrary.
        # 56 MiB scoped VMEM: above the 16/32 MiB defaults, safe under v7x's
        # 64 MiB physical.  TODO(synk): raise toward ~100 MiB on v5e/v6e for
        # large N, and add row tiling (parallel axis) before N ~ 1.5k on v7x.
        compiler_params=pltpu.CompilerParams(
            dimension_semantics=("arbitrary",),
            vmem_limit_bytes=56 * 1024 * 1024),
    )(feat_p, adj_p, w_p, b_p)

    return out[:n, :d]


# ---------------------- pure-JAX reference (for validation) ----------------------
def _reference_forward(features, adj_stack, weights, biases, *, keep_ratio, temp):
    ori = features
    n_hops, n_heads = weights.shape[0], weights.shape[1]
    for i in range(n_hops):
        adj = adj_stack[i]
        heads = []
        for j in range(n_heads):
            w = weights[i, j]
            b = biases[i, j]
            proj = features @ w + b
            hn = proj * lax.rsqrt(jnp.sum(proj * proj, -1, keepdims=True) + _EPS)
            cos = hn @ hn.T
            sim = jax.nn.sigmoid(cos / temp) * adj
            p = sim / (jnp.sum(sim, -1, keepdims=True) + _EPS)
            heads.append(keep_ratio * ori + (1.0 - keep_ratio) * (p @ features))
        features = jnp.mean(jnp.stack(heads, axis=2), axis=2)
    return features


if __name__ == "__main__":
    # Module hyper-parameters (small, consistent with the constructor).
    input_dim = 32
    hid_dim = 32
    keep_ratio = 0.5
    n_hop = 2            # => n_hop * 2 = 4 propagation hops
    n_heads = 2
    temp = 5.0
    N = 16               # number of graph nodes

    n_layers = n_hop * 2

    key = jax.random.PRNGKey(0)
    k_feat, k_adj, k_w, k_b = jax.random.split(key, 4)

    weights = 0.1 * jax.random.normal(
        k_w, (n_layers, n_heads, input_dim, hid_dim), dtype=jnp.float32)
    biases = 0.01 * jax.random.normal(
        k_b, (n_layers, n_heads, 1, hid_dim), dtype=jnp.float32)

    features = jax.random.normal(k_feat, (N, input_dim), dtype=jnp.float32)
    adj_keys = jax.random.split(k_adj, n_layers)
    adj_stack = jnp.stack([
        jnp.clip(
            (jax.random.uniform(ak, (N, N)) > 0.6).astype(jnp.float32)
            + jnp.eye(N, dtype=jnp.float32),
            0.0, 1.0)
        for ak in adj_keys
    ], axis=0)

    out = multihead_cosine_propagation_forward(
        features, adj_stack, weights, biases, keep_ratio=keep_ratio, temp=temp)
    out = jax.block_until_ready(out)

    ref = _reference_forward(
        features, adj_stack, weights, biases, keep_ratio=keep_ratio, temp=temp)
    assert out.shape == (N, input_dim)
    # Tolerance loosened vs. the pure-f32 reference because the two big matmuls
    # use bf16 operands (f32 accumulate), the sigmoid is the tanh identity, and
    # the row reciprocal is the approximate EUP op.
    assert jnp.allclose(out, ref, atol=2e-2, rtol=2e-2), "Pallas output mismatch"

    print("KERNEL_OK")
</pallas_src>

<mosaic_0001>
module attributes {stable_mosaic.version = 11 : i64} {
  func.func @_fused_prop_kernel(%arg0: i32, %arg1: memref<128x128xf32, #tpu.memory_space<vmem>>, %arg2: memref<1x128x128xbf16, #tpu.memory_space<vmem>>, %arg3: memref<1x2x128x128xf32, #tpu.memory_space<vmem>>, %arg4: memref<1x2x1x128xf32, #tpu.memory_space<vmem>>, %arg5: memref<128x128xf32, #tpu.memory_space<vmem>>, %arg6: memref<128x128xf32, #tpu.memory_space<vmem>>, %arg7: memref<128x128xf32, #tpu.memory_space<vmem>>) attributes {dimension_semantics = [#tpu.dimension_semantics<arbitrary>], iteration_bounds = array<i64: 4>, scalar_prefetch = 0 : i64, scratch_operands = 2 : i64, tpu.core_type = #tpu.core_type<tc>, window_params = [{pipeline_mode = #tpu.pipeline_mode<synchronous>, transform_indices = @transform_0, window_bounds = array<i64: 128, 128>}, {transform_indices = @transform_1, window_bounds = array<i64: 1, 128, 128>}, {transform_indices = @transform_2, window_bounds = array<i64: 1, 2, 128, 128>}, {transform_indices = @transform_3, window_bounds = array<i64: 1, 2, 1, 128>}, {pipeline_mode = #tpu.pipeline_mode<synchronous>, transform_indices = @transform_4, window_bounds = array<i64: 128, 128>}]} {
    %c0_i32 = arith.constant 0 : i32
    %0 = arith.cmpi eq, %arg0, %c0_i32 : i32
    %1 = arith.extui %0 : i1 to i32
    %c0_i32_0 = arith.constant 0 : i32
    %2 = arith.cmpi ne, %1, %c0_i32_0 : i32
    scf.if %2 {
      %c0_44 = arith.constant 0 : index
      %c0_45 = arith.constant 0 : index
      %86 = vector.load %arg1[%c0_44, %c0_45] : memref<128x128xf32, #tpu.memory_space<vmem>>, vector<128x128xf32>
      %c0_46 = arith.constant 0 : index
      %c0_47 = arith.constant 0 : index
      %87 = vector.load %arg6[%c0_46, %c0_47] : memref<128x128xf32, #tpu.memory_space<vmem>>, vector<128x128xf32>
      tpu.vector_store %arg6[%c0_46, %c0_47], %86 {strides = array<i32>} : memref<128x128xf32, #tpu.memory_space<vmem>>, vector<128x128xf32>,
      %cst_48 = arith.constant 5.000000e-01 : f32
      %88 = vector.broadcast %cst_48 : f32 to vector<128x128xf32>
      %89 = arith.mulf %88, %86 : vector<128x128xf32>
      %c0_49 = arith.constant 0 : index
      %c0_50 = arith.constant 0 : index
      %90 = vector.load %arg7[%c0_49, %c0_50] : memref<128x128xf32, #tpu.memory_space<vmem>>, vector<128x128xf32>
      tpu.vector_store %arg7[%c0_49, %c0_50], %89 {strides = array<i32>} : memref<128x128xf32, #tpu.memory_space<vmem>>, vector<128x128xf32>,
    } else {
    }
    %c0 = arith.constant 0 : index
    %c0_1 = arith.constant 0 : index
    %3 = vector.load %arg6[%c0, %c0_1] : memref<128x128xf32, #tpu.memory_space<vmem>>, vector<128x128xf32>
    %4 = arith.truncf %3 : vector<128x128xf32> to vector<128x128xbf16>
    %c0_2 = arith.constant 0 : index
    %c0_3 = arith.constant 0 : index
    %c0_4 = arith.constant 0 : index
    %5 = vector.load %arg2[%c0_2, %c0_3, %c0_4] : memref<1x128x128xbf16, #tpu.memory_space<vmem>>, vector<1x128x128xbf16>
    %6 = vector.shape_cast %5 : vector<1x128x128xbf16> to vector<128x128xbf16>
    %c0_5 = arith.constant 0 : index
    %c0_6 = arith.constant 0 : index
    %c0_7 = arith.constant 0 : index
    %c0_8 = arith.constant 0 : index
    %7 = vector.load %arg3[%c0_5, %c0_6, %c0_7, %c0_8] : memref<1x2x128x128xf32, #tpu.memory_space<vmem>>, vector<1x1x128x128xf32>
    %8 = vector.shape_cast %7 : vector<1x1x128x128xf32> to vector<128x128xf32>
    %cst = arith.constant dense<0.000000e+00> : vector<128x128xf32>
    %9 = tpu.matmul %3, %8, %cst {dimension_numbers = #tpu.dot_dimension_numbers<[1], [0], [0], [1], [0, 0, 1, 1], [], []>} : vector<128x128xf32>, vector<128x128xf32>, vector<128x128xf32> -> vector<128x128xf32>
    %c0_9 = arith.constant 0 : index
    %c0_10 = arith.constant 0 : index
    %c0_11 = arith.constant 0 : index
    %c0_12 = arith.constant 0 : index
    %10 = vector.load %arg4[%c0_9, %c0_10, %c0_11, %c0_12] : memref<1x2x1x128xf32, #tpu.memory_space<vmem>>, vector<1x1x1x128xf32>
    %11 = vector.shape_cast %10 : vector<1x1x1x128xf32> to vector<1x128xf32>
    %12 = vector.broadcast %11 : vector<1x128xf32> to vector<128x128xf32>
    %13 = arith.addf %9, %12 : vector<128x128xf32>
    %14 = arith.mulf %13, %13 : vector<128x128xf32>
    %cst_13 = arith.constant dense<0.000000e+00> : vector<128xf32>
    %15 = vector.multi_reduction <add>, %14, %cst_13 [1] : vector<128x128xf32> to vector<128xf32>
    %16 = vector.shape_cast %15 : vector<128xf32> to vector<128x1xf32>
    %cst_14 = arith.constant 9.99999993E-9 : f32
    %17 = vector.broadcast %cst_14 : f32 to vector<128x1xf32>
    %18 = arith.addf %16, %17 : vector<128x1xf32>
    %19 = math.rsqrt %18 : vector<128x1xf32>
    %20 = vector.broadcast %19 : vector<128x1xf32> to vector<128x128xf32>
    %21 = arith.mulf %13, %20 : vector<128x128xf32>
    %cst_15 = arith.constant 1.000000e-01 : f32
    %22 = vector.broadcast %cst_15 : f32 to vector<128x128xf32>
    %23 = arith.mulf %21, %22 : vector<128x128xf32>
    %24 = arith.truncf %23 : vector<128x128xf32> to vector<128x128xbf16>
    %25 = arith.truncf %21 : vector<128x128xf32> to vector<128x128xbf16>
    %cst_16 = arith.constant dense<0.000000e+00> : vector<128x128xf32>
    %26 = tpu.matmul %24, %25, %cst_16 {dimension_numbers = #tpu.dot_dimension_numbers<[1], [1], [0], [0], [0, 0, 1, 0], [], []>} : vector<128x128xbf16>, vector<128x128xbf16>, vector<128x128xf32> -> vector<128x128xf32>
    %27 = math.tanh %26 : vector<128x128xf32>
    %cst_17 = arith.constant 5.000000e-01 : f32
    %28 = vector.broadcast %cst_17 : f32 to vector<128x128xf32>
    %29 = arith.mulf %28, %27 : vector<128x128xf32>
    %cst_18 = arith.constant 5.000000e-01 : f32
    %30 = vector.broadcast %cst_18 : f32 to vector<128x128xf32>
    %31 = arith.addf %30, %29 : vector<128x128xf32>
    %32 = arith.extf %6 : vector<128x128xbf16> to vector<128x128xf32>
    %33 = arith.mulf %31, %32 : vector<128x128xf32>
    %cst_19 = arith.constant dense<0.000000e+00> : vector<128xf32>
    %34 = vector.multi_reduction <add>, %33, %cst_19 [1] : vector<128x128xf32> to vector<128xf32>
    %35 = vector.shape_cast %34 : vector<128xf32> to vector<128x1xf32>
    %cst_20 = arith.constant 9.99999993E-9 : f32
    %36 = vector.broadcast %cst_20 : f32 to vector<128x1xf32>
    %37 = arith.addf %35, %36 : vector<128x1xf32>
    %38 = tpu.reciprocal %37 {approx = true} : vector<128x1xf32> -> vector<128x1xf32>
    %39 = vector.broadcast %38 : vector<128x1xf32> to vector<128x128xf32>
    %40 = arith.mulf %33, %39 : vector<128x128xf32>
    %c0_21 = arith.constant 0 : index
    %c1 = arith.constant 1 : index
    %c0_22 = arith.constant 0 : index
    %c0_23 = arith.constant 0 : index
    %41 = vector.load %arg3[%c0_21, %c1, %c0_22, %c0_23] : memref<1x2x128x128xf32, #tpu.memory_space<vmem>>, vector<1x1x128x128xf32>
    %42 = vector.shape_cast %41 : vector<1x1x128x128xf32> to vector<128x128xf32>
    %cst_24 = arith.constant dense<0.000000e+00> : vector<128x128xf32>
    %43 = tpu.matmul %3, %42, %cst_24 {dimension_numbers = #tpu.dot_dimension_numbers<[1], [0], [0], [1], [0, 0, 1, 1], [], []>} : vector<128x128xf32>, vector<128x128xf32>, vector<128x128xf32> -> vector<128x128xf32>
    %c0_25 = arith.constant 0 : index
    %c1_26 = arith.constant 1 : index
    %c0_27 = arith.constant 0 : index
    %c0_28 = arith.constant 0 : index
    %44 = vector.load %arg4[%c0_25, %c1_26, %c0_27, %c0_28] : memref<1x2x1x128xf32, #tpu.memory_space<vmem>>, vector<1x1x1x128xf32>
    %45 = vector.shape_cast %44 : vector<1x1x1x128xf32> to vector<1x128xf32>
    %46 = vector.broadcast %45 : vector<1x128xf32> to vector<128x128xf32>
    %47 = arith.addf %43, %46 : vector<128x128xf32>
    %48 = arith.mulf %47, %47 : vector<128x128xf32>
    %cst_29 = arith.constant dense<0.000000e+00> : vector<128xf32>
    %49 = vector.multi_reduction <add>, %48, %cst_29 [1] : vector<128x128xf32> to vector<128xf32>
    %50 = vector.shape_cast %49 : vector<128xf32> to vector<128x1xf32>
    %cst_30 = arith.constant 9.99999993E-9 : f32
    %51 = vector.broadcast %cst_30 : f32 to vector<128x1xf32>
    %52 = arith.addf %50, %51 : vector<128x1xf32>
    %53 = math.rsqrt %52 : vector<128x1xf32>
    %54 = vector.broadcast %53 : vector<128x1xf32> to vector<128x128xf32>
    %55 = arith.mulf %47, %54 : vector<128x128xf32>
    %cst_31 = arith.constant 1.000000e-01 : f32
    %56 = vector.broadcast %cst_31 : f32 to vector<128x128xf32>
    %57 = arith.mulf %55, %56 : vector<128x128xf32>
    %58 = arith.truncf %57 : vector<128x128xf32> to vector<128x128xbf16>
    %59 = arith.truncf %55 : vector<128x128xf32> to vector<128x128xbf16>
    %cst_32 = arith.constant dense<0.000000e+00> : vector<128x128xf32>
    %60 = tpu.matmul %58, %59, %cst_32 {dimension_numbers = #tpu.dot_dimension_numbers<[1], [1], [0], [0], [0, 0, 1, 0], [], []>} : vector<128x128xbf16>, vector<128x128xbf16>, vector<128x128xf32> -> vector<128x128xf32>
    %61 = math.tanh %60 : vector<128x128xf32>
    %cst_33 = arith.constant 5.000000e-01 : f32
    %62 = vector.broadcast %cst_33 : f32 to vector<128x128xf32>
    %63 = arith.mulf %62, %61 : vector<128x128xf32>
    %cst_34 = arith.constant 5.000000e-01 : f32
    %64 = vector.broadcast %cst_34 : f32 to vector<128x128xf32>
    %65 = arith.addf %64, %63 : vector<128x128xf32>
    %66 = arith.extf %6 : vector<128x128xbf16> to vector<128x128xf32>
    %67 = arith.mulf %65, %66 : vector<128x128xf32>
    %cst_35 = arith.constant dense<0.000000e+00> : vector<128xf32>
    %68 = vector.multi_reduction <add>, %67, %cst_35 [1] : vector<128x128xf32> to vector<128xf32>
    %69 = vector.shape_cast %68 : vector<128xf32> to vector<128x1xf32>
    %cst_36 = arith.constant 9.99999993E-9 : f32
    %70 = vector.broadcast %cst_36 : f32 to vector<128x1xf32>
    %71 = arith.addf %69, %70 : vector<128x1xf32>
    %72 = tpu.reciprocal %71 {approx = true} : vector<128x1xf32> -> vector<128x1xf32>
    %73 = vector.broadcast %72 : vector<128x1xf32> to vector<128x128xf32>
    %74 = arith.mulf %67, %73 : vector<128x128xf32>
    %75 = arith.addf %40, %74 : vector<128x128xf32>
    %76 = arith.truncf %75 : vector<128x128xf32> to vector<128x128xbf16>
    %cst_37 = arith.constant dense<0.000000e+00> : vector<128x128xf32>
    %77 = tpu.matmul %76, %4, %cst_37 {dimension_numbers = #tpu.dot_dimension_numbers<[1], [0], [0], [1], [0, 0, 1, 1], [], []>} : vector<128x128xbf16>, vector<128x128xbf16>, vector<128x128xf32> -> vector<128x128xf32>
    %c0_38 = arith.constant 0 : index
    %c0_39 = arith.constant 0 : index
    %78 = vector.load %arg7[%c0_38, %c0_39] : memref<128x128xf32, #tpu.memory_space<vmem>>, vector<128x128xf32>
    %cst_40 = arith.constant 2.500000e-01 : f32
    %79 = vector.broadcast %cst_40 : f32 to vector<128x128xf32>
    %80 = arith.mulf %79, %77 : vector<128x128xf32>
    %81 = arith.addf %78, %80 : vector<128x128xf32>
    %c0_41 = arith.constant 0 : index
    %c0_42 = arith.constant 0 : index
    %82 = vector.load %arg6[%c0_41, %c0_42] : memref<128x128xf32, #tpu.memory_space<vmem>>, vector<128x128xf32>
    tpu.vector_store %arg6[%c0_41, %c0_42], %81 {strides = array<i32>} : memref<128x128xf32, #tpu.memory_space<vmem>>, vector<128x128xf32>,
    %c3_i32 = arith.constant 3 : i32
    %83 = arith.cmpi eq, %arg0, %c3_i32 : i32
    %84 = arith.extui %83 : i1 to i32
    %c0_i32_43 = arith.constant 0 : i32
    %85 = arith.cmpi ne, %84, %c0_i32_43 : i32
    scf.if %85 {
      %c0_44 = arith.constant 0 : index
      %c0_45 = arith.constant 0 : index
      %86 = vector.load %arg5[%c0_44, %c0_45] : memref<128x128xf32, #tpu.memory_space<vmem>>, vector<128x128xf32>
      tpu.vector_store %arg5[%c0_44, %c0_45], %81 {strides = array<i32>} : memref<128x128xf32, #tpu.memory_space<vmem>>, vector<128x128xf32>,
    } else {
    }
    return
  }
  func.func @transform_0(%arg0: i32) -> (i32, i32) {
    %c0_i32 = arith.constant 0 : i32
    %c0_i32_0 = arith.constant 0 : i32
    %c0_i32_1 = arith.constant 0 : i32
    return %c0_i32, %c0_i32_0 : i32, i32
  }
  func.func @transform_1(%arg0: i32) -> (i32, i32, i32) {
    %c0_i32 = arith.constant 0 : i32
    %c0_i32_0 = arith.constant 0 : i32
    %c0_i32_1 = arith.constant 0 : i32
    return %arg0, %c0_i32, %c0_i32_0 : i32, i32, i32
  }
  func.func @transform_2(%arg0: i32) -> (i32, i32, i32, i32) {
    %c0_i32 = arith.constant 0 : i32
    %c0_i32_0 = arith.constant 0 : i32
    %c0_i32_1 = arith.constant 0 : i32
    %c0_i32_2 = arith.constant 0 : i32
    return %arg0, %c0_i32, %c0_i32_0, %c0_i32_1 : i32, i32, i32, i32
  }
  func.func @transform_3(%arg0: i32) -> (i32, i32, i32, i32) {
    %c0_i32 = arith.constant 0 : i32
    %c0_i32_0 = arith.constant 0 : i32
    %c0_i32_1 = arith.constant 0 : i32
    %c0_i32_2 = arith.constant 0 : i32
    return %arg0, %c0_i32, %c0_i32_0, %c0_i32_1 : i32, i32, i32, i32
  }
  func.func @transform_4(%arg0: i32) -> (i32, i32) {
    %c0_i32 = arith.constant 0 : i32
    %c0_i32_0 = arith.constant 0 : i32
    %c0_i32_1 = arith.constant 0 : i32
    return %c0_i32, %c0_i32_0 : i32, i32
  }
}

</mosaic_0001>

<llo_original>
// kernel: tpu_custom_call.1
$region0: #{tpu_custom_call.1}
  #allocation0 [shape = 'u32[]', space=smem, size = 0x4, offset = 0x4, fixed_abs, tag = 'smem constant byte address 0x4 - core index']
  #allocation1 [shape = 'u32[144,128]{1,0:T(1,128)}', space=vmem, size = 0x12000, scoped, tag = 'internal scratch']
  #allocation2 [shape = 'f32[128,128]{1,0:T(8,128)}', space=vmem, size = 0x10000, scoped, tag = 'scratch operand']
  #allocation3 [shape = 'f32[128,128]{1,0:T(8,128)}', space=vmem, size = 0x10000, scoped, tag = 'scratch operand']
  %s0 = inlined_call_operand.hbm [shape: f32[128,128], index: 0, kind: input, shape index: {}]
  %s1 = inlined_call_operand.hbm [shape: bf16[4,128,128], index: 1, kind: input, shape index: {}]
  %s2 = inlined_call_operand.hbm [shape: f32[4,2,128,128], index: 2, kind: input, shape index: {}]
  %s3 = inlined_call_operand.vmem [shape: f32[4,2,1,128], index: 3, kind: input, shape index: {}]
  %s4 = inlined_call_operand.hbm [shape: f32[128,128], index: 4, kind: output, shape index: {}]
  %s5 = sld [smem:[#allocation0]]
  $region69: #{tpu_custom_call.1} parent=0
    _
  %s7 = ssub.s32 1, %s5
  %s8 = scalar_select 0, %s7, %s5
  $region1: #{tpu_custom_call.1} parent=0
    #allocation4 [shape = 'u8[65536]{0}', space=vmem, size = 0x10000, scoped, tag = 'input window, operand 0, single buffered']
    #allocation5 [shape = 's32[2]{0}', space=sflag, size = 0x8, scoped, tag = 'scoped memory for tpu_custom_call.1']
    #allocation6 [shape = 's32[2]{0}', space=sflag, size = 0x8, scoped, tag = 'scoped memory for tpu_custom_call.1']
    #allocation7 [shape = 'u8[65536]{0}', space=vmem, size = 0x10000, scoped, tag = 'input window, operand 1']
    #allocation8 [shape = 's32[2]{0}', space=sflag, size = 0x8, scoped, tag = 'scoped memory for tpu_custom_call.1']
    #allocation9 [shape = 'u8[262144]{0}', space=vmem, size = 0x40000, scoped, tag = 'input window, operand 2']
    #allocation10 [shape = 'u8[65536]{0}', space=vmem, size = 0x10000, scoped, tag = 'output window, operand 0, single buffered']
    %9 = vsyncpa [#allocation5], 0
    %10 = vsyncpa [#allocation8], 0
    %s11 = scalar_lea.sflag [#allocation8], 1
    %12 = vsyncpa %s11, 0
    %13 = vsyncpa [#allocation6], 0
    loop: start=0, step=1, limit=6
    $region2: #{tpu_custom_call.1} parent=1 // loop_pre_header
      _
    $region3: #{tpu_custom_call.1} parent=1 // loop_header
      %s15 = sphi 0, %s19
      %p16 = scmp.ge.s32.totalorder %s15, 6
      %s23 = sphi 0, %s23
      %s25 = sphi 0, %s23
      %s26 = sphi 0, %s25
      %s40 = sphi 0, %s26
      %s46 = sphi 0, %s48
      %s49 = sphi 0, %s46
      %s50 = sphi 0, %s49
      %s66 = sphi 0, %s50
      %s72 = sphi 0, %s74
      %s75 = sphi 0, %s72
      %s76 = sphi 0, %s75
      %s92 = sphi 0, %s76
      %s98 = sphi 0, %s100
      %s101 = sphi 0, %s98
      %s102 = sphi 0, %s101
      %s118 = sphi 0, %s102
      %s122 = sphi 0, %s122
      %s124 = sphi 0, %s122
      %s125 = sphi 0, %s124
      %s139 = sphi 0, %s125
    $region4: #{tpu_custom_call.1} parent=1 // loop_header_branch
      %18 = sbr.rel (%p16) target = $region8
    $region5: #{tpu_custom_call.1} parent=1 // loop_body
      %s20 = ssub.s32 %s15, 1
      %s21 = ssub.s32 %s15, 2
      %s22 = sadd.s32 %s15, 1
      %s24 = sadd.s32 %s23, 1
      %p27 = scmp.eq.s32.totalorder %s15, 3
      %p28 = scmp.ne.s32.totalorder %s23, %s25
      %p29 = scmp.eq.s32.totalorder %s15, 0
      %p30 = por %p28, %p29
      %p31 = scmp.ne.s32.totalorder %s23, %s25
      %p32 = scmp.eq.s32.totalorder %s20, 3
      %p33 = por %p31, %p32
      %p34 = scmp.ne.s32.totalorder %s25, %s26
      %p35 = scmp.eq.s32.totalorder %s20, 0
      %p36 = por %p34, %p35
      %p37 = scmp.ne.s32.totalorder %s25, %s26
      %p38 = scmp.eq.s32.totalorder %s21, 3
      %p39 = por %p37, %p38
      %p41 = scmp.ne.s32.totalorder %s26, %s40
      %p42 = scmp.eq.s32.totalorder %s21, 0
      %p43 = por %p41, %p42
      %s44 = ssub.s32 %s15, %s22
      %p45 = scmp.eq.s32.totalorder %s44, 0
      %s47 = sadd.s32 %s46, 1
      %s48 = scalar_select %p45, %s46, %s47
      %p51 = pneg %p45
      %p52 = scmp.eq.s32.totalorder %s15, 3
      %p53 = por %p51, %p52
      %p54 = scmp.ne.s32.totalorder %s46, %s49
      %p55 = scmp.eq.s32.totalorder %s15, 0
      %p56 = por %p54, %p55
      %p57 = scmp.ne.s32.totalorder %s46, %s49
      %p58 = scmp.eq.s32.totalorder %s20, 3
      %p59 = por %p57, %p58
      %p60 = scmp.ne.s32.totalorder %s49, %s50
      %p61 = scmp.eq.s32.totalorder %s20, 0
      %p62 = por %p60, %p61
      %p63 = scmp.ne.s32.totalorder %s49, %s50
      %p64 = scmp.eq.s32.totalorder %s21, 3
      %p65 = por %p63, %p64
      %p67 = scmp.ne.s32.totalorder %s50, %s66
      %p68 = scmp.eq.s32.totalorder %s21, 0
      %p69 = por %p67, %p68
      %s70 = ssub.s32 %s15, %s22
      %p71 = scmp.eq.s32.totalorder %s70, 0
      %s73 = sadd.s32 %s72, 1
      %s74 = scalar_select %p71, %s72, %s73
      %p77 = pneg %p71
      %p78 = scmp.eq.s32.totalorder %s15, 3
      %p79 = por %p77, %p78
      %p80 = scmp.ne.s32.totalorder %s72, %s75
      %p81 = scmp.eq.s32.totalorder %s15, 0
      %p82 = por %p80, %p81
      %p83 = scmp.ne.s32.totalorder %s72, %s75
      %p84 = scmp.eq.s32.totalorder %s20, 3
      %p85 = por %p83, %p84
      %p86 = scmp.ne.s32.totalorder %s75, %s76
      %p87 = scmp.eq.s32.totalorder %s20, 0
      %p88 = por %p86, %p87
      %p89 = scmp.ne.s32.totalorder %s75, %s76
      %p90 = scmp.eq.s32.totalorder %s21, 3
      %p91 = por %p89, %p90
      %p93 = scmp.ne.s32.totalorder %s76, %s92
      %p94 = scmp.eq.s32.totalorder %s21, 0
      %p95 = por %p93, %p94
      %s96 = ssub.s32 %s15, %s22
      %p97 = scmp.eq.s32.totalorder %s96, 0
      %s99 = sadd.s32 %s98, 1
      %s100 = scalar_select %p97, %s98, %s99
      %p103 = pneg %p97
      %p104 = scmp.eq.s32.totalorder %s15, 3
      %p105 = por %p103, %p104
      %p106 = scmp.ne.s32.totalorder %s98, %s101
      %p107 = scmp.eq.s32.totalorder %s15, 0
      %p108 = por %p106, %p107
      %p109 = scmp.ne.s32.totalorder %s98, %s101
      %p110 = scmp.eq.s32.totalorder %s20, 3
      %p111 = por %p109, %p110
      %p112 = scmp.ne.s32.totalorder %s101, %s102
      %p113 = scmp.eq.s32.totalorder %s20, 0
      %p114 = por %p112, %p113
      %p115 = scmp.ne.s32.totalorder %s101, %s102
      %p116 = scmp.eq.s32.totalorder %s21, 3
      %p117 = por %p115, %p116
      %p119 = scmp.ne.s32.totalorder %s102, %s118
      %p120 = scmp.eq.s32.totalorder %s21, 0
      %p121 = por %p119, %p120
      %s123 = sadd.s32 %s122, 1
      %p126 = scmp.eq.s32.totalorder %s15, 3
      %p127 = scmp.ne.s32.totalorder %s122, %s124
      %p128 = scmp.eq.s32.totalorder %s15, 0
      %p129 = por %p127, %p128
      %p130 = scmp.ne.s32.totalorder %s122, %s124
      %p131 = scmp.eq.s32.totalorder %s20, 3
      %p132 = por %p130, %p131
      %p133 = scmp.ne.s32.totalorder %s124, %s125
      %p134 = scmp.eq.s32.totalorder %s20, 0
      %p135 = por %p133, %p134
      %p136 = scmp.ne.s32.totalorder %s124, %s125
      %p137 = scmp.eq.s32.totalorder %s21, 3
      %p138 = por %p136, %p137
      %p140 = scmp.ne.s32.totalorder %s125, %s139
      %p141 = scmp.eq.s32.totalorder %s21, 0
      %p142 = por %p140, %p141
      %p143 = scmp.le.s32.totalorder 1, %s15
      %p144 = scmp.lt.s32.totalorder %s15, 5
      %p145 = pnand %p143, %p144
      %p146 = pneg %p145
      // Predicated region
      $region9: #{tpu_custom_call.1} parent=5 // pred_check
        _
      $region10: #{tpu_custom_call.1} parent=5 // pred_check_branch
        %148 = sbr.rel (%p145) target = $region12
      $region11: #{tpu_custom_call.1} parent=5 // pred_region
        %s149 = ssub.s32 %s15, 1
        // Predicated region
        $region13: #{tpu_custom_call.1} parent=11 // pred_check
          %p150 = pneg %p36
        $region14: #{tpu_custom_call.1} parent=11 // pred_check_branch
          %152 = sbr.rel (%p150) target = $region16
        $region15: #{tpu_custom_call.1} parent=11 // pred_region
          %s154 = ssub.s32 2048, 2048
          %155 = vsyncadd [#allocation5], %s154
          %s156 = sshll.u32 [#allocation4], 4
          %s157 = int_to_ptr.vmem [resolvable:$true] %s156
          %162 = dma.hbm_to_vmem [thread:$0]  %s0, 2048, %s157, [#allocation5], 128, 128, 8
        $region16: #{tpu_custom_call.1} parent=11 // pred_fallthru
          _
      $region12: #{tpu_custom_call.1} parent=5 // pred_fallthru
        _
      %p163 = scmp.lt.s32.totalorder %s15, 4
      // Predicated region
      $region17: #{tpu_custom_call.1} parent=5 // pred_check
        %p164 = pneg %p163
      $region18: #{tpu_custom_call.1} parent=5 // pred_check_branch
        %166 = sbr.rel (%p164) target = $region20
      $region19: #{tpu_custom_call.1} parent=5 // pred_region
        // Predicated region
        $region21: #{tpu_custom_call.1} parent=19 // pred_check
          %p167 = pneg %p56
        $region22: #{tpu_custom_call.1} parent=19 // pred_check_branch
          %169 = sbr.rel (%p167) target = $region24
        $region23: #{tpu_custom_call.1} parent=19 // pred_region
          %s170 = sand.u32 %s15, 1
          %s171 = scalar_lea.sflag [#allocation8], %s170
          %s172 = sand.u32 %s46, 1
          %s173 = smul.addr %s172, 64
          %s174 = scalar_lea.vmem [#allocation7], %s173
          %s176 = ssub.s32 1024, 1024
          %177 = vsyncadd %s171, %s176
          %s178 = smul.addr %s15, 16
          %s179 = smul.addr %s178, 64
          %s180 = scalar_lea.hbm %s1, %s179
          %s181 = sshll.u32 %s174, 4
          %s182 = int_to_ptr.vmem [resolvable:$true] %s181
          %187 = dma.hbm_to_vmem [thread:$0]  %s180, 1024, %s182, %s171, 64, 64, 4
        $region24: #{tpu_custom_call.1} parent=19 // pred_fallthru
          _
        // Predicated region
        $region25: #{tpu_custom_call.1} parent=19 // pred_check
          %p188 = pneg %p82
        $region26: #{tpu_custom_call.1} parent=19 // pred_check_branch
          %190 = sbr.rel (%p188) target = $region28
        $region27: #{tpu_custom_call.1} parent=19 // pred_region
          %s191 = sand.u32 %s15, 1
          %s192 = scalar_lea.sflag [#allocation8], %s191
          %s193 = sand.u32 %s72, 1
          %s194 = smul.addr %s193, 256
          %s195 = scalar_lea.vmem [#allocation9], %s194
          %s197 = ssub.s32 4096, 4096
          %198 = vsyncadd %s192, %s197
          %s199 = smul.addr %s15, 32
          %s200 = smul.addr %s199, 128
          %s201 = scalar_lea.hbm %s2, %s200
          %s202 = sshll.u32 %s195, 4
          %s203 = int_to_ptr.vmem [resolvable:$true] %s202
          %208 = dma.hbm_to_vmem [thread:$0]  %s201, 4096, %s203, %s192, 128, 128, 8
        $region28: #{tpu_custom_call.1} parent=19 // pred_fallthru
          _
        // Predicated region
        $region29: #{tpu_custom_call.1} parent=19 // pred_check
          %p209 = pneg %p108
        $region30: #{tpu_custom_call.1} parent=19 // pred_check_branch
          %211 = sbr.rel (%p209) target = $region32
        $region31: #{tpu_custom_call.1} parent=19 // pred_region
          %p212 = scmp.lt.s32.totalorder %s15, 3
          %s213 = scalar_select %p212, %s15, 3
          %s214 = smul.addr %s213, 2
          %s215 = scalar_lea.vmem %s3, %s214
        $region32: #{tpu_custom_call.1} parent=19 // pred_fallthru
          _
      $region20: #{tpu_custom_call.1} parent=5 // pred_fallthru
        _
      %p216 = scmp.le.s32.totalorder 1, %s15
      %p217 = scmp.lt.s32.totalorder %s15, 5
      %p218 = pnand %p216, %p217
      %p219 = pneg %p218
      // Predicated region
      $region33: #{tpu_custom_call.1} parent=5 // pred_check
        _
      $region34: #{tpu_custom_call.1} parent=5 // pred_check_branch
        %221 = sbr.rel (%p218) target = $region36
      $region35: #{tpu_custom_call.1} parent=5 // pred_region
        %s222 = ssub.s32 %s15, 1
        // Predicated region
        $region37: #{tpu_custom_call.1} parent=35 // pred_check
          %p223 = pneg %p36
        $region38: #{tpu_custom_call.1} parent=35 // pred_check_branch
          %225 = sbr.rel (%p223) target = $region40
        $region39: #{tpu_custom_call.1} parent=35 // pred_region
          %226 = dma.done [#allocation5], 2048
        $region40: #{tpu_custom_call.1} parent=35 // pred_fallthru
          _
        %s227 = sand.u32 %s20, 1
        %s228 = scalar_lea.sflag [#allocation8], %s227
        %s229 = sand.u32 %s49, 1
        %s230 = smul.addr %s229, 64
        %s231 = scalar_lea.vmem [#allocation7], %s230
        // Predicated region
        $region41: #{tpu_custom_call.1} parent=35 // pred_check
          %p232 = pneg %p62
        $region42: #{tpu_custom_call.1} parent=35 // pred_check_branch
          %234 = sbr.rel (%p232) target = $region44
        $region43: #{tpu_custom_call.1} parent=35 // pred_region
          %235 = dma.done %s228, 1024
        $region44: #{tpu_custom_call.1} parent=35 // pred_fallthru
          _
        %s236 = sand.u32 %s20, 1
        %s237 = scalar_lea.sflag [#allocation8], %s236
        %s238 = sand.u32 %s75, 1
        %s239 = smul.addr %s238, 256
        %s240 = scalar_lea.vmem [#allocation9], %s239
        // Predicated region
        $region45: #{tpu_custom_call.1} parent=35 // pred_check
          %p241 = pneg %p88
        $region46: #{tpu_custom_call.1} parent=35 // pred_check_branch
          %243 = sbr.rel (%p241) target = $region48
        $region47: #{tpu_custom_call.1} parent=35 // pred_region
          %244 = dma.done %s237, 4096
        $region48: #{tpu_custom_call.1} parent=35 // pred_fallthru
          _
        %p245 = pneg %p36
        %p246 = pneg %p33
        %s247 = sand.u32 %s20, 1
        %s248 = scalar_lea.sflag [#allocation8], %s247
        %s249 = sand.u32 %s49, 1
        %s250 = smul.addr %s249, 64
        %s251 = scalar_lea.vmem [#allocation7], %s250
        %p252 = pneg %p62
        %p253 = pneg %p59
        %s254 = sand.u32 %s20, 1
        %s255 = scalar_lea.sflag [#allocation8], %s254
        %s256 = sand.u32 %s75, 1
        %s257 = smul.addr %s256, 256
        %s258 = scalar_lea.vmem [#allocation9], %s257
        %p259 = pneg %p88
        %p260 = pneg %p85
        %p261 = scmp.lt.s32.totalorder %s20, 3
        %s262 = scalar_select %p261, %s20, 3
        %s263 = smul.addr %s262, 2
        %s264 = scalar_lea.vmem %s3, %s263
        %p265 = pneg %p114
        %p266 = pneg %p111
        %p267 = pneg %p135
        %p268 = pneg %p132
        %p269 = scmp.lt.s32.totalorder %s20, 3
        %s270 = scalar_select %p269, %s20, 3
        %s271 = smul.addr %s270, 2
        %s272 = scalar_lea.vmem %s3, %s271
        %p274 = scmp.eq.s32.totalorder %s20, 0
        // Predicated region
        $region49: #{tpu_custom_call.1} parent=35 // pred_check
          %p275 = pneg %p274
        $region50: #{tpu_custom_call.1} parent=35 // pred_check_branch
          %277 = sbr.rel (%p275) target = $region52
        $region51: #{tpu_custom_call.1} parent=35 // pred_region
          %v278 = vld [vmem:[#allocation4] sm:$0xff]
          %v279 = vld [vmem:[#allocation4 + $0x8] sm:$0xff]
          %v280 = vld [vmem:[#allocation4 + $0x10] sm:$0xff]
          %v281 = vld [vmem:[#allocation4 + $0x18] sm:$0xff]
          %v282 = vld [vmem:[#allocation4 + $0x20] sm:$0xff]
          %v283 = vld [vmem:[#allocation4 + $0x28] sm:$0xff]
          %v284 = vld [vmem:[#allocation4 + $0x30] sm:$0xff]
          %v285 = vld [vmem:[#allocation4 + $0x38] sm:$0xff]
          %v286 = vld [vmem:[#allocation4 + $0x40] sm:$0xff]
          %v287 = vld [vmem:[#allocation4 + $0x48] sm:$0xff]
          %v288 = vld [vmem:[#allocation4 + $0x50] sm:$0xff]
          %v289 = vld [vmem:[#allocation4 + $0x58] sm:$0xff]
          %v290 = vld [vmem:[#allocation4 + $0x60] sm:$0xff]
          %v291 = vld [vmem:[#allocation4 + $0x68] sm:$0xff]
          %v292 = vld [vmem:[#allocation4 + $0x70] sm:$0xff]
          %v293 = vld [vmem:[#allocation4 + $0x78] sm:$0xff]
          %294 = vst [vmem:[#allocation2] sm:$0xff] %v278
          %295 = vst [vmem:[#allocation2 + $0x8] sm:$0xff] %v279
          %296 = vst [vmem:[#allocation2 + $0x10] sm:$0xff] %v280
          %297 = vst [vmem:[#allocation2 + $0x18] sm:$0xff] %v281
          %298 = vst [vmem:[#allocation2 + $0x20] sm:$0xff] %v282
          %299 = vst [vmem:[#allocation2 + $0x28] sm:$0xff] %v283
          %300 = vst [vmem:[#allocation2 + $0x30] sm:$0xff] %v284
          %301 = vst [vmem:[#allocation2 + $0x38] sm:$0xff] %v285
          %302 = vst [vmem:[#allocation2 + $0x40] sm:$0xff] %v286
          %303 = vst [vmem:[#allocation2 + $0x48] sm:$0xff] %v287
          %304 = vst [vmem:[#allocation2 + $0x50] sm:$0xff] %v288
          %305 = vst [vmem:[#allocation2 + $0x58] sm:$0xff] %v289
          %306 = vst [vmem:[#allocation2 + $0x60] sm:$0xff] %v290
          %307 = vst [vmem:[#allocation2 + $0x68] sm:$0xff] %v291
          %308 = vst [vmem:[#allocation2 + $0x70] sm:$0xff] %v292
          %309 = vst [vmem:[#allocation2 + $0x78] sm:$0xff] %v293
          %v310 = vmul.f32 %v278, 0.5
          %v311 = vmul.f32 %v279, 0.5
          %v312 = vmul.f32 %v280, 0.5
          %v313 = vmul.f32 %v281, 0.5
          %v314 = vmul.f32 %v282, 0.5
          %v315 = vmul.f32 %v283, 0.5
          %v316 = vmul.f32 %v284, 0.5
          %v317 = vmul.f32 %v285, 0.5
          %v318 = vmul.f32 %v286, 0.5
          %v319 = vmul.f32 %v287, 0.5
          %v320 = vmul.f32 %v288, 0.5
          %v321 = vmul.f32 %v289, 0.5
          %v322 = vmul.f32 %v290, 0.5
          %v323 = vmul.f32 %v291, 0.5
          %v324 = vmul.f32 %v292, 0.5
          %v325 = vmul.f32 %v293, 0.5
          %326 = vst [vmem:[#allocation3] sm:$0xff] %v310
          %327 = vst [vmem:[#allocation3 + $0x8] sm:$0xff] %v311
          %328 = vst [vmem:[#allocation3 + $0x10] sm:$0xff] %v312
          %329 = vst [vmem:[#allocation3 + $0x18] sm:$0xff] %v313
          %330 = vst [vmem:[#allocation3 + $0x20] sm:$0xff] %v314
          %331 = vst [vmem:[#allocation3 + $0x28] sm:$0xff] %v315
          %332 = vst [vmem:[#allocation3 + $0x30] sm:$0xff] %v316
          %333 = vst [vmem:[#allocation3 + $0x38] sm:$0xff] %v317
          %334 = vst [vmem:[#allocation3 + $0x40] sm:$0xff] %v318
          %335 = vst [vmem:[#allocation3 + $0x48] sm:$0xff] %v319
          %336 = vst [vmem:[#allocation3 + $0x50] sm:$0xff] %v320
          %337 = vst [vmem:[#allocation3 + $0x58] sm:$0xff] %v321
          %338 = vst [vmem:[#allocation3 + $0x60] sm:$0xff] %v322
          %339 = vst [vmem:[#allocation3 + $0x68] sm:$0xff] %v323
          %340 = vst [vmem:[#allocation3 + $0x70] sm:$0xff] %v324
          %341 = vst [vmem:[#allocation3 + $0x78] sm:$0xff] %v325
        $region52: #{tpu_custom_call.1} parent=35 // pred_fallthru
          _
        %v342 = vld [vmem:[#allocation2] sm:$0xff]
        %v343 = vld [vmem:[#allocation2 + $0x8] sm:$0xff]
        %v344 = vld [vmem:[#allocation2 + $0x10] sm:$0xff]
        %v345 = vld [vmem:[#allocation2 + $0x18] sm:$0xff]
        %v346 = vld [vmem:[#allocation2 + $0x20] sm:$0xff]
        %v347 = vld [vmem:[#allocation2 + $0x28] sm:$0xff]
        %v348 = vld [vmem:[#allocation2 + $0x30] sm:$0xff]
        %v349 = vld [vmem:[#allocation2 + $0x38] sm:$0xff]
        %v350 = vld [vmem:[#allocation2 + $0x40] sm:$0xff]
        %v351 = vld [vmem:[#allocation2 + $0x48] sm:$0xff]
        %v352 = vld [vmem:[#allocation2 + $0x50] sm:$0xff]
        %v353 = vld [vmem:[#allocation2 + $0x58] sm:$0xff]
        %v354 = vld [vmem:[#allocation2 + $0x60] sm:$0xff]
        %v355 = vld [vmem:[#allocation2 + $0x68] sm:$0xff]
        %v356 = vld [vmem:[#allocation2 + $0x70] sm:$0xff]
        %v357 = vld [vmem:[#allocation2 + $0x78] sm:$0xff]
        %v358 = vpack.c.bf16 %v343, %v342
        %v359 = vpack.c.bf16 %v345, %v344
        %v360 = vpack.c.bf16 %v347, %v346
        %v361 = vpack.c.bf16 %v349, %v348
        %v362 = vpack.c.bf16 %v351, %v350
        %v363 = vpack.c.bf16 %v353, %v352
        %v364 = vpack.c.bf16 %v355, %v354
        %v365 = vpack.c.bf16 %v357, %v356
        %v366 = vld [vmem:[%s231] sm:$0xf]
        %v367 = vld [vmem:[%s231 + $0x4] sm:$0xf]
        %v368 = vld [vmem:[%s231 + $0x8] sm:$0xf]
        %v369 = vld [vmem:[%s231 + $0xc] sm:$0xf]
        %v370 = vld [vmem:[%s231 + $0x10] sm:$0xf]
        %v371 = vld [vmem:[%s231 + $0x14] sm:$0xf]
        %v372 = vld [vmem:[%s231 + $0x18] sm:$0xf]
        %v373 = vld [vmem:[%s231 + $0x1c] sm:$0xf]
        %v374 = vld [vmem:[%s231 + $0x20] sm:$0xf]
        %v375 = vld [vmem:[%s231 + $0x24] sm:$0xf]
        %v376 = vld [vmem:[%s231 + $0x28] sm:$0xf]
        %v377 = vld [vmem:[%s231 + $0x2c] sm:$0xf]
        %v378 = vld [vmem:[%s231 + $0x30] sm:$0xf]
        %v379 = vld [vmem:[%s231 + $0x34] sm:$0xf]
        %v380 = vld [vmem:[%s231 + $0x38] sm:$0xf]
        %v381 = vld [vmem:[%s231 + $0x3c] sm:$0xf]
        %v382 = vld [vmem:[%s240] sm:$0xff]
        %v383 = vld [vmem:[%s240 + $0x8] sm:$0xff]
        %v384 = vld [vmem:[%s240 + $0x10] sm:$0xff]
        %v385 = vld [vmem:[%s240 + $0x18] sm:$0xff]
        %v386 = vld [vmem:[%s240 + $0x20] sm:$0xff]
        %v387 = vld [vmem:[%s240 + $0x28] sm:$0xff]
        %v388 = vld [vmem:[%s240 + $0x30] sm:$0xff]
        %v389 = vld [vmem:[%s240 + $0x38] sm:$0xff]
        %v390 = vld [vmem:[%s240 + $0x40] sm:$0xff]
        %v391 = vld [vmem:[%s240 + $0x48] sm:$0xff]
        %v392 = vld [vmem:[%s240 + $0x50] sm:$0xff]
        %v393 = vld [vmem:[%s240 + $0x58] sm:$0xff]
        %v394 = vld [vmem:[%s240 + $0x60] sm:$0xff]
        %v395 = vld [vmem:[%s240 + $0x68] sm:$0xff]
        %v396 = vld [vmem:[%s240 + $0x70] sm:$0xff]
        %v397 = vld [vmem:[%s240 + $0x78] sm:$0xff]
        %v398 = vld [vmem:[%s272] sm:$0x1]
        %v400 = vlaneseq
        %v401 = vshrl.u32 %v400, 7
        %v402 = vsub.s32 0, %v401
        %v403 = vrot.slane %v398, %v402
        %405 = vmatprep.subr.mxu0 0.0
        %406 = vmatpush1.msra.mxu0 %v382
        %407 = vmatprep.subr.mxu0 0.0
        %408 = vmatpush1.msra.mxu0 %v383
        %409 = vmatprep.subr.mxu0 0.0
        %410 = vmatpush1.msra.mxu0 %v384
        %411 = vmatprep.subr.mxu0 0.0
        %412 = vmatpush1.msra.mxu0 %v385
        %413 = vmatprep.subr.mxu0 0.0
        %414 = vmatpush1.msra.mxu0 %v386
        %415 = vmatprep.subr.mxu0 0.0
        %416 = vmatpush1.msra.mxu0 %v387
        %417 = vmatprep.subr.mxu0 0.0
        %418 = vmatpush1.msra.mxu0 %v388
        %419 = vmatprep.subr.mxu0 0.0
        %420 = vmatpush1.msra.mxu0 %v389
        %421 = vmatprep.subr.mxu0 0.0
        %422 = vmatpush1.msra.mxu0 %v390
        %423 = vmatprep.subr.mxu0 0.0
        %424 = vmatpush1.msra.mxu0 %v391
        %425 = vmatprep.subr.mxu0 0.0
        %426 = vmatpush1.msra.mxu0 %v392
        %427 = vmatprep.subr.mxu0 0.0
        %428 = vmatpush1.msra.mxu0 %v393
        %429 = vmatprep.subr.mxu0 0.0
        %430 = vmatpush1.msra.mxu0 %v394
        %431 = vmatprep.subr.mxu0 0.0
        %432 = vmatpush1.msra.mxu0 %v395
        %433 = vmatprep.subr.mxu0 0.0
        %434 = vmatpush1.msra.mxu0 %v396
        %435 = vmatprep.subr.mxu0 0.0
        %436 = vmatpush1.msra.mxu0 %v397
        %437 = vmatprep.subr.mxu0 0.0
        %438 = vmatpush1.msra.mxu0 0.0
        %439 = vmatprep.subr.mxu0 0.0
        %440 = vmatpush1.msra.mxu0 0.0
        %441 = vmatprep.subr.mxu0 0.0
        %442 = vmatpush1.msra.mxu0 0.0
        %443 = vmatprep.subr.mxu0 0.0
        %444 = vmatpush1.msra.mxu0 0.0
        %445 = vmatprep.subr.mxu0 0.0
        %446 = vmatpush1.msra.mxu0 0.0
        %447 = vmatprep.subr.mxu0 0.0
        %448 = vmatpush1.msra.mxu0 0.0
        %449 = vmatprep.subr.mxu0 0.0
        %450 = vmatpush1.msra.mxu0 0.0
        %451 = vmatprep.subr.mxu0 0.0
        %452 = vmatpush1.msra.mxu0 0.0
        %453 = vmatprep.subr.mxu0 0.0
        %454 = vmatpush1.msra.mxu0 0.0
        %455 = vmatprep.subr.mxu0 0.0
        %456 = vmatpush1.msra.mxu0 0.0
        %457 = vmatprep.subr.mxu0 0.0
        %458 = vmatpush1.msra.mxu0 0.0
        %459 = vmatprep.subr.mxu0 0.0
        %460 = vmatpush1.msra.mxu0 0.0
        %461 = vmatprep.subr.mxu0 0.0
        %462 = vmatpush1.msra.mxu0 0.0
        %463 = vmatprep.subr.mxu0 0.0
        %464 = vmatpush1.msra.mxu0 0.0
        %465 = vmatprep.subr.mxu0 0.0
        %466 = vmatpush1.msra.mxu0 0.0
        %467 = vmatprep.subr.mxu0 0.0
        %468 = vmatpush1.msra.mxu0 0.0
        %469 = vmatprep.mubr.f32.mxu0 0.0
        %470 = vmatmul.mubr.f32.gmra.mrb[0].mxu0 %v342
        %v471 = vpop.f32.mrb[0].mxu0
        %v472 = vadd.f32 %v403, %v471
        %v473 = vpop.f32.mrb[0].mxu0
        %474 = vmatprep.mubr.f32.mxu0 0.0
        %475 = vmatmul.mubr.f32.gmra.mrb[0].mxu0 %v343
        %v476 = vpop.f32.mrb[0].mxu0
        %v477 = vadd.f32 %v403, %v476
        %v478 = vpop.f32.mrb[0].mxu0
        %479 = vmatprep.mubr.f32.mxu0 0.0
        %480 = vmatmul.mubr.f32.gmra.mrb[0].mxu0 %v344
        %v481 = vpop.f32.mrb[0].mxu0
        %v482 = vadd.f32 %v403, %v481
        %v483 = vpop.f32.mrb[0].mxu0
        %484 = vmatprep.mubr.f32.mxu0 0.0
        %485 = vmatmul.mubr.f32.gmra.mrb[0].mxu0 %v345
        %v486 = vpop.f32.mrb[0].mxu0
        %v487 = vadd.f32 %v403, %v486
        %v488 = vpop.f32.mrb[0].mxu0
        %489 = vmatprep.mubr.f32.mxu0 0.0
        %490 = vmatmul.mubr.f32.gmra.mrb[0].mxu0 %v346
        %v491 = vpop.f32.mrb[0].mxu0
        %v492 = vadd.f32 %v403, %v491
        %v493 = vpop.f32.mrb[0].mxu0
        %494 = vmatprep.mubr.f32.mxu0 0.0
        %495 = vmatmul.mubr.f32.gmra.mrb[0].mxu0 %v347
        %v496 = vpop.f32.mrb[0].mxu0
        %v497 = vadd.f32 %v403, %v496
        %v498 = vpop.f32.mrb[0].mxu0
        %499 = vmatprep.mubr.f32.mxu0 0.0
        %500 = vmatmul.mubr.f32.gmra.mrb[0].mxu0 %v348
        %v501 = vpop.f32.mrb[0].mxu0
        %v502 = vadd.f32 %v403, %v501
        %v503 = vpop.f32.mrb[0].mxu0
        %504 = vmatprep.mubr.f32.mxu0 0.0
        %505 = vmatmul.mubr.f32.gmra.mrb[0].mxu0 %v349
        %v506 = vpop.f32.mrb[0].mxu0
        %v507 = vadd.f32 %v403, %v506
        %v508 = vpop.f32.mrb[0].mxu0
        %509 = vmatprep.mubr.f32.mxu0 0.0
        %510 = vmatmul.mubr.f32.gmra.mrb[0].mxu0 %v350
        %v511 = vpop.f32.mrb[0].mxu0
        %v512 = vadd.f32 %v403, %v511
        %v513 = vpop.f32.mrb[0].mxu0
        %514 = vmatprep.mubr.f32.mxu0 0.0
        %515 = vmatmul.mubr.f32.gmra.mrb[0].mxu0 %v351
        %v516 = vpop.f32.mrb[0].mxu0
        %v517 = vadd.f32 %v403, %v516
        %v518 = vpop.f32.mrb[0].mxu0
        %519 = vmatprep.mubr.f32.mxu0 0.0
        %520 = vmatmul.mubr.f32.gmra.mrb[0].mxu0 %v352
        %v521 = vpop.f32.mrb[0].mxu0
        %v522 = vadd.f32 %v403, %v521
        %v523 = vpop.f32.mrb[0].mxu0
        %524 = vmatprep.mubr.f32.mxu0 0.0
        %525 = vmatmul.mubr.f32.gmra.mrb[0].mxu0 %v353
        %v526 = vpop.f32.mrb[0].mxu0
        %v527 = vadd.f32 %v403, %v526
        %v528 = vpop.f32.mrb[0].mxu0
        %529 = vmatprep.mubr.f32.mxu0 0.0
        %530 = vmatmul.mubr.f32.gmra.mrb[0].mxu0 %v354
        %v531 = vpop.f32.mrb[0].mxu0
        %v532 = vadd.f32 %v403, %v531
        %v533 = vpop.f32.mrb[0].mxu0
        %534 = vmatprep.mubr.f32.mxu0 0.0
        %535 = vmatmul.mubr.f32.gmra.mrb[0].mxu0 %v355
        %v536 = vpop.f32.mrb[0].mxu0
        %v537 = vadd.f32 %v403, %v536
        %v538 = vpop.f32.mrb[0].mxu0
        %539 = vmatprep.mubr.f32.mxu0 0.0
        %540 = vmatmul.mubr.f32.gmra.mrb[0].mxu0 %v356
        %v541 = vpop.f32.mrb[0].mxu0
        %v542 = vadd.f32 %v403, %v541
        %v543 = vpop.f32.mrb[0].mxu0
        %544 = vmatprep.mubr.f32.mxu0 0.0
        %545 = vmatmul.mubr.f32.gmra.mrb[0].mxu0 %v357
        %v546 = vpop.f32.mrb[0].mxu0
        %v547 = vadd.f32 %v403, %v546
        %v548 = vpop.f32.mrb[0].mxu0
        %549 = vdwg.mxu0
        %v550 = vmul.f32 %v472, %v472
        %v551 = vmul.f32 %v477, %v477
        %v552 = vmul.f32 %v482, %v482
        %v553 = vmul.f32 %v487, %v487
        %v554 = vmul.f32 %v492, %v492
        %v555 = vmul.f32 %v497, %v497
        %v556 = vmul.f32 %v502, %v502
        %v557 = vmul.f32 %v507, %v507
        %v558 = vmul.f32 %v512, %v512
        %v559 = vmul.f32 %v517, %v517
        %v560 = vmul.f32 %v522, %v522
        %v561 = vmul.f32 %v527, %v527
        %v562 = vmul.f32 %v532, %v532
        %v563 = vmul.f32 %v537, %v537
        %v564 = vmul.f32 %v542, %v542
        %v565 = vmul.f32 %v547, %v547
        %566 = vadd.xlane.f32.xlu0 %v550
        %v567 = vpop.xlane.xlu0 %566
        %568 = vadd.xlane.f32.xlu0 %v551
        %v569 = vpop.xlane.xlu0 %568
        %570 = vadd.xlane.f32.xlu0 %v552
        %v571 = vpop.xlane.xlu0 %570
        %572 = vadd.xlane.f32.xlu0 %v553
        %v573 = vpop.xlane.xlu0 %572
        %574 = vadd.xlane.f32.xlu0 %v554
        %v575 = vpop.xlane.xlu0 %574
        %576 = vadd.xlane.f32.xlu0 %v555
        %v577 = vpop.xlane.xlu0 %576
        %578 = vadd.xlane.f32.xlu0 %v556
        %v579 = vpop.xlane.xlu0 %578
        %580 = vadd.xlane.f32.xlu0 %v557
        %v581 = vpop.xlane.xlu0 %580
        %582 = vadd.xlane.f32.xlu0 %v558
        %v583 = vpop.xlane.xlu0 %582
        %584 = vadd.xlane.f32.xlu0 %v559
        %v585 = vpop.xlane.xlu0 %584
        %586 = vadd.xlane.f32.xlu0 %v560
        %v587 = vpop.xlane.xlu0 %586
        %588 = vadd.xlane.f32.xlu0 %v561
        %v589 = vpop.xlane.xlu0 %588
        %590 = vadd.xlane.f32.xlu0 %v562
        %v591 = vpop.xlane.xlu0 %590
        %592 = vadd.xlane.f32.xlu0 %v563
        %v593 = vpop.xlane.xlu0 %592
        %594 = vadd.xlane.f32.xlu0 %v564
        %v595 = vpop.xlane.xlu0 %594
        %596 = vadd.xlane.f32.xlu0 %v565
        %v597 = vpop.xlane.xlu0 %596
        %v598 = vadd.f32 %v567, 1e-08
        %v599 = vadd.f32 %v569, 1e-08
        %v600 = vadd.f32 %v571, 1e-08
        %v601 = vadd.f32 %v573, 1e-08
        %v602 = vadd.f32 %v575, 1e-08
        %v603 = vadd.f32 %v577, 1e-08
        %v604 = vadd.f32 %v579, 1e-08
        %v605 = vadd.f32 %v581, 1e-08
        %v606 = vadd.f32 %v583, 1e-08
        %v607 = vadd.f32 %v585, 1e-08
        %v608 = vadd.f32 %v587, 1e-08
        %v609 = vadd.f32 %v589, 1e-08
        %v610 = vadd.f32 %v591, 1e-08
        %v611 = vadd.f32 %v593, 1e-08
        %v612 = vadd.f32 %v595, 1e-08
        %v613 = vadd.f32 %v597, 1e-08
        %v614 = vrsqrt.pop %v598
        %v615 = vrsqrt.pop %v599
        %v616 = vrsqrt.pop %v600
        %v617 = vrsqrt.pop %v601
        %v618 = vrsqrt.pop %v602
        %v619 = vrsqrt.pop %v603
        %v620 = vrsqrt.pop %v604
        %v621 = vrsqrt.pop %v605
        %v622 = vrsqrt.pop %v606
        %v623 = vrsqrt.pop %v607
        %v624 = vrsqrt.pop %v608
        %v625 = vrsqrt.pop %v609
        %v626 = vrsqrt.pop %v610
        %v627 = vrsqrt.pop %v611
        %v628 = vrsqrt.pop %v612
        %v629 = vrsqrt.pop %v613
        %v630 = vmul.f32 %v472, %v614
        %v631 = vmul.f32 %v477, %v615
        %v632 = vmul.f32 %v482, %v616
        %v633 = vmul.f32 %v487, %v617
        %v634 = vmul.f32 %v492, %v618
        %v635 = vmul.f32 %v497, %v619
        %v636 = vmul.f32 %v502, %v620
        %v637 = vmul.f32 %v507, %v621
        %v638 = vmul.f32 %v512, %v622
        %v639 = vmul.f32 %v517, %v623
        %v640 = vmul.f32 %v522, %v624
        %v641 = vmul.f32 %v527, %v625
        %v642 = vmul.f32 %v532, %v626
        %v643 = vmul.f32 %v537, %v627
        %v644 = vmul.f32 %v542, %v628
        %v645 = vmul.f32 %v547, %v629
        %v646 = vmul.f32 %v630, 0.1
        %v647 = vmul.f32 %v631, 0.1
        %v648 = vmul.f32 %v632, 0.1
        %v649 = vmul.f32 %v633, 0.1
        %v650 = vmul.f32 %v634, 0.1
        %v651 = vmul.f32 %v635, 0.1
        %v652 = vmul.f32 %v636, 0.1
        %v653 = vmul.f32 %v637, 0.1
        %v654 = vmul.f32 %v638, 0.1
        %v655 = vmul.f32 %v639, 0.1
        %v656 = vmul.f32 %v640, 0.1
        %v657 = vmul.f32 %v641, 0.1
        %v658 = vmul.f32 %v642, 0.1
        %v659 = vmul.f32 %v643, 0.1
        %v660 = vmul.f32 %v644, 0.1
        %v661 = vmul.f32 %v645, 0.1
        %v662 = vpack.c.bf16 %v647, %v646
        %v663 = vpack.c.bf16 %v649, %v648
        %v664 = vpack.c.bf16 %v651, %v650
        %v665 = vpack.c.bf16 %v653, %v652
        %v666 = vpack.c.bf16 %v655, %v654
        %v667 = vpack.c.bf16 %v657, %v656
        %v668 = vpack.c.bf16 %v659, %v658
        %v669 = vpack.c.bf16 %v661, %v660
        %v670 = vpack.c.bf16 %v631, %v630
        %v671 = vpack.c.bf16 %v633, %v632
        %v672 = vpack.c.bf16 %v635, %v634
        %v673 = vpack.c.bf16 %v637, %v636
        %v674 = vpack.c.bf16 %v639, %v638
        %v675 = vpack.c.bf16 %v641, %v640
        %v676 = vpack.c.bf16 %v643, %v642
        %v677 = vpack.c.bf16 %v645, %v644
        %678 = vmatprep.subr.bf16.mxu0 0
        %679 = vmatpush1.bf16.xpose.msra.mxu0 %v670
        %680 = vmatprep.subr.bf16.mxu0 0
        %681 = vmatpush1.bf16.xpose.msra.mxu0 %v671
        %682 = vmatprep.subr.bf16.mxu0 0
        %683 = vmatpush1.bf16.xpose.msra.mxu0 %v672
        %684 = vmatprep.subr.bf16.mxu0 0
        %685 = vmatpush1.bf16.xpose.msra.mxu0 %v673
        %686 = vmatprep.subr.bf16.mxu0 0
        %687 = vmatpush1.bf16.xpose.msra.mxu0 %v674
        %688 = vmatprep.subr.bf16.mxu0 0
        %689 = vmatpush1.bf16.xpose.msra.mxu0 %v675
        %690 = vmatprep.subr.bf16.mxu0 0
        %691 = vmatpush1.bf16.xpose.msra.mxu0 %v676
        %692 = vmatprep.subr.bf16.mxu0 0
        %693 = vmatpush1.bf16.xpose.msra.mxu0 %v677
        %694 = vmatprep.subr.bf16.mxu0 0
        %695 = vmatpush1.bf16.xpose.msra.mxu0 0
        %696 = vmatprep.subr.bf16.mxu0 0
        %697 = vmatpush1.bf16.xpose.msra.mxu0 0
        %698 = vmatprep.subr.bf16.mxu0 0
        %699 = vmatpush1.bf16.xpose.msra.mxu0 0
        %700 = vmatprep.subr.bf16.mxu0 0
        %701 = vmatpush1.bf16.xpose.msra.mxu0 0
        %702 = vmatprep.subr.bf16.mxu0 0
        %703 = vmatpush1.bf16.xpose.msra.mxu0 0
        %704 = vmatprep.subr.bf16.mxu0 0
        %705 = vmatpush1.bf16.xpose.msra.mxu0 0
        %706 = vmatprep.subr.bf16.mxu0 0
        %707 = vmatpush1.bf16.xpose.msra.mxu0 0
        %708 = vmatprep.subr.bf16.mxu0 0
        %709 = vmatpush1.bf16.xpose.msra.mxu0 0
        %710 = vmatprep.mubr.bf16.mxu0 0
        %711 = vmatmul.mubr.bf16.gmra.mrb[0].mxu0 %v662
        %v712 = vpop.f32.mrb[0].mxu0
        %v713 = vadd.f32 0.0, %v712
        %v714 = vpop.f32.mrb[0].mxu0
        %v715 = vpop.f32.mrb[0].mxu0
        %v716 = vadd.f32 0.0, %v715
        %v717 = vpop.f32.mrb[0].mxu0
        %718 = vmatprep.mubr.bf16.mxu0 0
        %719 = vmatmul.mubr.bf16.gmra.mrb[0].mxu0 %v663
        %v720 = vpop.f32.mrb[0].mxu0
        %v721 = vadd.f32 0.0, %v720
        %v722 = vpop.f32.mrb[0].mxu0
        %v723 = vpop.f32.mrb[0].mxu0
        %v724 = vadd.f32 0.0, %v723
        %v725 = vpop.f32.mrb[0].mxu0
        %726 = vmatprep.mubr.bf16.mxu0 0
        %727 = vmatmul.mubr.bf16.gmra.mrb[0].mxu0 %v664
        %v728 = vpop.f32.mrb[0].mxu0
        %v729 = vadd.f32 0.0, %v728
        %v730 = vpop.f32.mrb[0].mxu0
        %v731 = vpop.f32.mrb[0].mxu0
        %v732 = vadd.f32 0.0, %v731
        %v733 = vpop.f32.mrb[0].mxu0
        %734 = vmatprep.mubr.bf16.mxu0 0
        %735 = vmatmul.mubr.bf16.gmra.mrb[0].mxu0 %v665
        %v736 = vpop.f32.mrb[0].mxu0
        %v737 = vadd.f32 0.0, %v736
        %v738 = vpop.f32.mrb[0].mxu0
        %v739 = vpop.f32.mrb[0].mxu0
        %v740 = vadd.f32 0.0, %v739
        %v741 = vpop.f32.mrb[0].mxu0
        %742 = vmatprep.mubr.bf16.mxu0 0
        %743 = vmatmul.mubr.bf16.gmra.mrb[0].mxu0 %v666
        %v744 = vpop.f32.mrb[0].mxu0
        %v745 = vadd.f32 0.0, %v744
        %v746 = vpop.f32.mrb[0].mxu0
        %v747 = vpop.f32.mrb[0].mxu0
        %v748 = vadd.f32 0.0, %v747
        %v749 = vpop.f32.mrb[0].mxu0
        %750 = vmatprep.mubr.bf16.mxu0 0
        %751 = vmatmul.mubr.bf16.gmra.mrb[0].mxu0 %v667
        %v752 = vpop.f32.mrb[0].mxu0
        %v753 = vadd.f32 0.0, %v752
        %v754 = vpop.f32.mrb[0].mxu0
        %v755 = vpop.f32.mrb[0].mxu0
        %v756 = vadd.f32 0.0, %v755
        %v757 = vpop.f32.mrb[0].mxu0
        %758 = vmatprep.mubr.bf16.mxu0 0
        %759 = vmatmul.mubr.bf16.gmra.mrb[0].mxu0 %v668
        %v760 = vpop.f32.mrb[0].mxu0
        %v761 = vadd.f32 0.0, %v760
        %v762 = vpop.f32.mrb[0].mxu0
        %v763 = vpop.f32.mrb[0].mxu0
        %v764 = vadd.f32 0.0, %v763
        %v765 = vpop.f32.mrb[0].mxu0
        %766 = vmatprep.mubr.bf16.mxu0 0
        %767 = vmatmul.mubr.bf16.gmra.mrb[0].mxu0 %v669
        %v768 = vpop.f32.mrb[0].mxu0
        %v769 = vadd.f32 0.0, %v768
        %v770 = vpop.f32.mrb[0].mxu0
        %v771 = vpop.f32.mrb[0].mxu0
        %v772 = vadd.f32 0.0, %v771
        %v773 = vpop.f32.mrb[0].mxu0
        %774 = vdwg.mxu0
        %v775 = vtanh.pop %v713
        %v776 = vtanh.pop %v716
        %v777 = vtanh.pop %v721
        %v778 = vtanh.pop %v724
        %v779 = vtanh.pop %v729
        %v780 = vtanh.pop %v732
        %v781 = vtanh.pop %v737
        %v782 = vtanh.pop %v740
        %v783 = vtanh.pop %v745
        %v784 = vtanh.pop %v748
        %v785 = vtanh.pop %v753
        %v786 = vtanh.pop %v756
        %v787 = vtanh.pop %v761
        %v788 = vtanh.pop %v764
        %v789 = vtanh.pop %v769
        %v790 = vtanh.pop %v772
        %v791 = vmul.f32 %v775, 0.5
        %v792 = vmul.f32 %v776, 0.5
        %v793 = vmul.f32 %v777, 0.5
        %v794 = vmul.f32 %v778, 0.5
        %v795 = vmul.f32 %v779, 0.5
        %v796 = vmul.f32 %v780, 0.5
        %v797 = vmul.f32 %v781, 0.5
        %v798 = vmul.f32 %v782, 0.5
        %v799 = vmul.f32 %v783, 0.5
        %v800 = vmul.f32 %v784, 0.5
        %v801 = vmul.f32 %v785, 0.5
        %v802 = vmul.f32 %v786, 0.5
        %v803 = vmul.f32 %v787, 0.5
        %v804 = vmul.f32 %v788, 0.5
        %v805 = vmul.f32 %v789, 0.5
        %v806 = vmul.f32 %v790, 0.5
        %v807 = vadd.f32 %v791, 0.5
        %v808 = vadd.f32 %v792, 0.5
        %v809 = vadd.f32 %v793, 0.5
        %v810 = vadd.f32 %v794, 0.5
        %v811 = vadd.f32 %v795, 0.5
        %v812 = vadd.f32 %v796, 0.5
        %v813 = vadd.f32 %v797, 0.5
        %v814 = vadd.f32 %v798, 0.5
        %v815 = vadd.f32 %v799, 0.5
        %v816 = vadd.f32 %v800, 0.5
        %v817 = vadd.f32 %v801, 0.5
        %v818 = vadd.f32 %v802, 0.5
        %v819 = vadd.f32 %v803, 0.5
        %v820 = vadd.f32 %v804, 0.5
        %v821 = vadd.f32 %v805, 0.5
        %v822 = vadd.f32 %v806, 0.5
        %v823 = vunpack.c.l.bf16 %v366
        %v824 = vunpack.c.l.bf16 %v367
        %v825 = vunpack.c.l.bf16 %v368
        %v826 = vunpack.c.l.bf16 %v369
        %v827 = vunpack.c.l.bf16 %v370
        %v828 = vunpack.c.l.bf16 %v371
        %v829 = vunpack.c.l.bf16 %v372
        %v830 = vunpack.c.l.bf16 %v373
        %v831 = vunpack.c.l.bf16 %v374
        %v832 = vunpack.c.l.bf16 %v375
        %v833 = vunpack.c.l.bf16 %v376
        %v834 = vunpack.c.l.bf16 %v377
        %v835 = vunpack.c.l.bf16 %v378
        %v836 = vunpack.c.l.bf16 %v379
        %v837 = vunpack.c.l.bf16 %v380
        %v838 = vunpack.c.l.bf16 %v381
        %v839 = vmul.f32 %v807, %v823
        %v840 = vmul.f32 %v808, %v824
        %v841 = vmul.f32 %v809, %v825
        %v842 = vmul.f32 %v810, %v826
        %v843 = vmul.f32 %v811, %v827
        %v844 = vmul.f32 %v812, %v828
        %v845 = vmul.f32 %v813, %v829
        %v846 = vmul.f32 %v814, %v830
        %v847 = vmul.f32 %v815, %v831
        %v848 = vmul.f32 %v816, %v832
        %v849 = vmul.f32 %v817, %v833
        %v850 = vmul.f32 %v818, %v834
        %v851 = vmul.f32 %v819, %v835
        %v852 = vmul.f32 %v820, %v836
        %v853 = vmul.f32 %v821, %v837
        %v854 = vmul.f32 %v822, %v838
        %855 = vadd.xlane.f32.xlu0 %v839
        %v856 = vpop.xlane.xlu0 %855
        %857 = vadd.xlane.f32.xlu0 %v840
        %v858 = vpop.xlane.xlu0 %857
        %859 = vadd.xlane.f32.xlu0 %v841
        %v860 = vpop.xlane.xlu0 %859
        %861 = vadd.xlane.f32.xlu0 %v842
        %v862 = vpop.xlane.xlu0 %861
        %863 = vadd.xlane.f32.xlu0 %v843
        %v864 = vpop.xlane.xlu0 %863
        %865 = vadd.xlane.f32.xlu0 %v844
        %v866 = vpop.xlane.xlu0 %865
        %867 = vadd.xlane.f32.xlu0 %v845
        %v868 = vpop.xlane.xlu0 %867
        %869 = vadd.xlane.f32.xlu0 %v846
        %v870 = vpop.xlane.xlu0 %869
        %871 = vadd.xlane.f32.xlu0 %v847
        %v872 = vpop.xlane.xlu0 %871
        %873 = vadd.xlane.f32.xlu0 %v848
        %v874 = vpop.xlane.xlu0 %873
        %875 = vadd.xlane.f32.xlu0 %v849
        %v876 = vpop.xlane.xlu0 %875
        %877 = vadd.xlane.f32.xlu0 %v850
        %v878 = vpop.xlane.xlu0 %877
        %879 = vadd.xlane.f32.xlu0 %v851
        %v880 = vpop.xlane.xlu0 %879
        %881 = vadd.xlane.f32.xlu0 %v852
        %v882 = vpop.xlane.xlu0 %881
        %883 = vadd.xlane.f32.xlu0 %v853
        %v884 = vpop.xlane.xlu0 %883
        %885 = vadd.xlane.f32.xlu0 %v854
        %v886 = vpop.xlane.xlu0 %885
        %v887 = vadd.f32 %v856, 1e-08
        %v888 = vadd.f32 %v858, 1e-08
        %v889 = vadd.f32 %v860, 1e-08
        %v890 = vadd.f32 %v862, 1e-08
        %v891 = vadd.f32 %v864, 1e-08
        %v892 = vadd.f32 %v866, 1e-08
        %v893 = vadd.f32 %v868, 1e-08
        %v894 = vadd.f32 %v870, 1e-08
        %v895 = vadd.f32 %v872, 1e-08
        %v896 = vadd.f32 %v874, 1e-08
        %v897 = vadd.f32 %v876, 1e-08
        %v898 = vadd.f32 %v878, 1e-08
        %v899 = vadd.f32 %v880, 1e-08
        %v900 = vadd.f32 %v882, 1e-08
        %v901 = vadd.f32 %v884, 1e-08
        %v902 = vadd.f32 %v886, 1e-08
        %v903 = vrcp.pop %v887
        %v904 = vrcp.pop %v888
        %v905 = vrcp.pop %v889
        %v906 = vrcp.pop %v890
        %v907 = vrcp.pop %v891
        %v908 = vrcp.pop %v892
        %v909 = vrcp.pop %v893
        %v910 = vrcp.pop %v894
        %v911 = vrcp.pop %v895
        %v912 = vrcp.pop %v896
        %v913 = vrcp.pop %v897
        %v914 = vrcp.pop %v898
        %v915 = vrcp.pop %v899
        %v916 = vrcp.pop %v900
        %v917 = vrcp.pop %v901
        %v918 = vrcp.pop %v902
        %v919 = vmul.f32 %v839, %v903
        %v920 = vmul.f32 %v840, %v904
        %v921 = vmul.f32 %v841, %v905
        %v922 = vmul.f32 %v842, %v906
        %v923 = vmul.f32 %v843, %v907
        %v924 = vmul.f32 %v844, %v908
        %v925 = vmul.f32 %v845, %v909
        %v926 = vmul.f32 %v846, %v910
        %v927 = vmul.f32 %v847, %v911
        %v928 = vmul.f32 %v848, %v912
        %v929 = vmul.f32 %v849, %v913
        %v930 = vmul.f32 %v850, %v914
        %v931 = vmul.f32 %v851, %v915
        %v932 = vmul.f32 %v852, %v916
        %v933 = vmul.f32 %v853, %v917
        %v934 = vmul.f32 %v854, %v918
        %s935 = scalar_lea.vmem %s240, 128 [#allocation9]
        %v936 = vld [vmem:[%s935] sm:$0xff]
        %v937 = vld [vmem:[%s935 + $0x8] sm:$0xff]
        %v938 = vld [vmem:[%s935 + $0x10] sm:$0xff]
        %v939 = vld [vmem:[%s935 + $0x18] sm:$0xff]
        %v940 = vld [vmem:[%s935 + $0x20] sm:$0xff]
        %v941 = vld [vmem:[%s935 + $0x28] sm:$0xff]
        %v942 = vld [vmem:[%s935 + $0x30] sm:$0xff]
        %v943 = vld [vmem:[%s935 + $0x38] sm:$0xff]
        %v944 = vld [vmem:[%s935 + $0x40] sm:$0xff]
        %v945 = vld [vmem:[%s935 + $0x48] sm:$0xff]
        %v946 = vld [vmem:[%s935 + $0x50] sm:$0xff]
        %v947 = vld [vmem:[%s935 + $0x58] sm:$0xff]
        %v948 = vld [vmem:[%s935 + $0x60] sm:$0xff]
        %v949 = vld [vmem:[%s935 + $0x68] sm:$0xff]
        %v950 = vld [vmem:[%s935 + $0x70] sm:$0xff]
        %v951 = vld [vmem:[%s935 + $0x78] sm:$0xff]
        %s952 = scalar_lea.vmem %s272, 1
        %v953 = vld [vmem:[%s952] sm:$0x1]
        %v955 = vlaneseq
        %v956 = vshrl.u32 %v955, 7
        %v957 = vsub.s32 0, %v956
        %v958 = vrot.slane %v953, %v957
        %960 = vmatprep.subr.mxu0 0.0
        %961 = vmatpush1.msra.mxu0 %v936
        %962 = vmatprep.subr.mxu0 0.0
        %963 = vmatpush1.msra.mxu0 %v937
        %964 = vmatprep.subr.mxu0 0.0
        %965 = vmatpush1.msra.mxu0 %v938
        %966 = vmatprep.subr.mxu0 0.0
        %967 = vmatpush1.msra.mxu0 %v939
        %968 = vmatprep.subr.mxu0 0.0
        %969 = vmatpush1.msra.mxu0 %v940
        %970 = vmatprep.subr.mxu0 0.0
        %971 = vmatpush1.msra.mxu0 %v941
        %972 = vmatprep.subr.mxu0 0.0
        %973 = vmatpush1.msra.mxu0 %v942
        %974 = vmatprep.subr.mxu0 0.0
        %975 = vmatpush1.msra.mxu0 %v943
        %976 = vmatprep.subr.mxu0 0.0
        %977 = vmatpush1.msra.mxu0 %v944
        %978 = vmatprep.subr.mxu0 0.0
        %979 = vmatpush1.msra.mxu0 %v945
        %980 = vmatprep.subr.mxu0 0.0
        %981 = vmatpush1.msra.mxu0 %v946
        %982 = vmatprep.subr.mxu0 0.0
        %983 = vmatpush1.msra.mxu0 %v947
        %984 = vmatprep.subr.mxu0 0.0
        %985 = vmatpush1.msra.mxu0 %v948
        %986 = vmatprep.subr.mxu0 0.0
        %987 = vmatpush1.msra.mxu0 %v949
        %988 = vmatprep.subr.mxu0 0.0
        %989 = vmatpush1.msra.mxu0 %v950
        %990 = vmatprep.subr.mxu0 0.0
        %991 = vmatpush1.msra.mxu0 %v951
        %992 = vmatprep.subr.mxu0 0.0
        %993 = vmatpush1.msra.mxu0 0.0
        %994 = vmatprep.subr.mxu0 0.0
        %995 = vmatpush1.msra.mxu0 0.0
        %996 = vmatprep.subr.mxu0 0.0
        %997 = vmatpush1.msra.mxu0 0.0
        %998 = vmatprep.subr.mxu0 0.0
        %999 = vmatpush1.msra.mxu0 0.0
        %1000 = vmatprep.subr.mxu0 0.0
        %1001 = vmatpush1.msra.mxu0 0.0
        %1002 = vmatprep.subr.mxu0 0.0
        %1003 = vmatpush1.msra.mxu0 0.0
        %1004 = vmatprep.subr.mxu0 0.0
        %1005 = vmatpush1.msra.mxu0 0.0
        %1006 = vmatprep.subr.mxu0 0.0
        %1007 = vmatpush1.msra.mxu0 0.0
        %1008 = vmatprep.subr.mxu0 0.0
        %1009 = vmatpush1.msra.mxu0 0.0
        %1010 = vmatprep.subr.mxu0 0.0
        %1011 = vmatpush1.msra.mxu0 0.0
        %1012 = vmatprep.subr.mxu0 0.0
        %1013 = vmatpush1.msra.mxu0 0.0
        %1014 = vmatprep.subr.mxu0 0.0
        %1015 = vmatpush1.msra.mxu0 0.0
        %1016 = vmatprep.subr.mxu0 0.0
        %1017 = vmatpush1.msra.mxu0 0.0
        %1018 = vmatprep.subr.mxu0 0.0
        %1019 = vmatpush1.msra.mxu0 0.0
        %1020 = vmatprep.subr.mxu0 0.0
        %1021 = vmatpush1.msra.mxu0 0.0
        %1022 = vmatprep.subr.mxu0 0.0
        %1023 = vmatpush1.msra.mxu0 0.0
        %1024 = vmatprep.mubr.f32.mxu0 0.0
        %1025 = vmatmul.mubr.f32.gmra.mrb[0].mxu0 %v342
        %v1026 = vpop.f32.mrb[0].mxu0
        %v1027 = vadd.f32 %v958, %v1026
        %v1028 = vpop.f32.mrb[0].mxu0
        %1029 = vmatprep.mubr.f32.mxu0 0.0
        %1030 = vmatmul.mubr.f32.gmra.mrb[0].mxu0 %v343
        %v1031 = vpop.f32.mrb[0].mxu0
        %v1032 = vadd.f32 %v958, %v1031
        %v1033 = vpop.f32.mrb[0].mxu0
        %1034 = vmatprep.mubr.f32.mxu0 0.0
        %1035 = vmatmul.mubr.f32.gmra.mrb[0].mxu0 %v344
        %v1036 = vpop.f32.mrb[0].mxu0
        %v1037 = vadd.f32 %v958, %v1036
        %v1038 = vpop.f32.mrb[0].mxu0
        %1039 = vmatprep.mubr.f32.mxu0 0.0
        %1040 = vmatmul.mubr.f32.gmra.mrb[0].mxu0 %v345
        %v1041 = vpop.f32.mrb[0].mxu0
        %v1042 = vadd.f32 %v958, %v1041
        %v1043 = vpop.f32.mrb[0].mxu0
        %1044 = vmatprep.mubr.f32.mxu0 0.0
        %1045 = vmatmul.mubr.f32.gmra.mrb[0].mxu0 %v346
        %v1046 = vpop.f32.mrb[0].mxu0
        %v1047 = vadd.f32 %v958, %v1046
        %v1048 = vpop.f32.mrb[0].mxu0
        %1049 = vmatprep.mubr.f32.mxu0 0.0
        %1050 = vmatmul.mubr.f32.gmra.mrb[0].mxu0 %v347
        %v1051 = vpop.f32.mrb[0].mxu0
        %v1052 = vadd.f32 %v958, %v1051
        %v1053 = vpop.f32.mrb[0].mxu0
        %1054 = vmatprep.mubr.f32.mxu0 0.0
        %1055 = vmatmul.mubr.f32.gmra.mrb[0].mxu0 %v348
        %v1056 = vpop.f32.mrb[0].mxu0
        %v1057 = vadd.f32 %v958, %v1056
        %v1058 = vpop.f32.mrb[0].mxu0
        %1059 = vmatprep.mubr.f32.mxu0 0.0
        %1060 = vmatmul.mubr.f32.gmra.mrb[0].mxu0 %v349
        %v1061 = vpop.f32.mrb[0].mxu0
        %v1062 = vadd.f32 %v958, %v1061
        %v1063 = vpop.f32.mrb[0].mxu0
        %1064 = vmatprep.mubr.f32.mxu0 0.0
        %1065 = vmatmul.mubr.f32.gmra.mrb[0].mxu0 %v350
        %v1066 = vpop.f32.mrb[0].mxu0
        %v1067 = vadd.f32 %v958, %v1066
        %v1068 = vpop.f32.mrb[0].mxu0
        %1069 = vmatprep.mubr.f32.mxu0 0.0
        %1070 = vmatmul.mubr.f32.gmra.mrb[0].mxu0 %v351
        %v1071 = vpop.f32.mrb[0].mxu0
        %v1072 = vadd.f32 %v958, %v1071
        %v1073 = vpop.f32.mrb[0].mxu0
        %1074 = vmatprep.mubr.f32.mxu0 0.0
        %1075 = vmatmul.mubr.f32.gmra.mrb[0].mxu0 %v352
        %v1076 = vpop.f32.mrb[0].mxu0
        %v1077 = vadd.f32 %v958, %v1076
        %v1078 = vpop.f32.mrb[0].mxu0
        %1079 = vmatprep.mubr.f32.mxu0 0.0
        %1080 = vmatmul.mubr.f32.gmra.mrb[0].mxu0 %v353
        %v1081 = vpop.f32.mrb[0].mxu0
        %v1082 = vadd.f32 %v958, %v1081
        %v1083 = vpop.f32.mrb[0].mxu0
        %1084 = vmatprep.mubr.f32.mxu0 0.0
        %1085 = vmatmul.mubr.f32.gmra.mrb[0].mxu0 %v354
        %v1086 = vpop.f32.mrb[0].mxu0
        %v1087 = vadd.f32 %v958, %v1086
        %v1088 = vpop.f32.mrb[0].mxu0
        %1089 = vmatprep.mubr.f32.mxu0 0.0
        %1090 = vmatmul.mubr.f32.gmra.mrb[0].mxu0 %v355
        %v1091 = vpop.f32.mrb[0].mxu0
        %v1092 = vadd.f32 %v958, %v1091
        %v1093 = vpop.f32.mrb[0].mxu0
        %1094 = vmatprep.mubr.f32.mxu0 0.0
        %1095 = vmatmul.mubr.f32.gmra.mrb[0].mxu0 %v356
        %v1096 = vpop.f32.mrb[0].mxu0
        %v1097 = vadd.f32 %v958, %v1096
        %v1098 = vpop.f32.mrb[0].mxu0
        %1099 = vmatprep.mubr.f32.mxu0 0.0
        %1100 = vmatmul.mubr.f32.gmra.mrb[0].mxu0 %v357
        %v1101 = vpop.f32.mrb[0].mxu0
        %v1102 = vadd.f32 %v958, %v1101
        %v1103 = vpop.f32.mrb[0].mxu0
        %1104 = vdwg.mxu0
        %v1105 = vmul.f32 %v1027, %v1027
        %v1106 = vmul.f32 %v1032, %v1032
        %v1107 = vmul.f32 %v1037, %v1037
        %v1108 = vmul.f32 %v1042, %v1042
        %v1109 = vmul.f32 %v1047, %v1047
        %v1110 = vmul.f32 %v1052, %v1052
        %v1111 = vmul.f32 %v1057, %v1057
        %v1112 = vmul.f32 %v1062, %v1062
        %v1113 = vmul.f32 %v1067, %v1067
        %v1114 = vmul.f32 %v1072, %v1072
        %v1115 = vmul.f32 %v1077, %v1077
        %v1116 = vmul.f32 %v1082, %v1082
        %v1117 = vmul.f32 %v1087, %v1087
        %v1118 = vmul.f32 %v1092, %v1092
        %v1119 = vmul.f32 %v1097, %v1097
        %v1120 = vmul.f32 %v1102, %v1102
        %1121 = vadd.xlane.f32.xlu0 %v1105
        %v1122 = vpop.xlane.xlu0 %1121
        %1123 = vadd.xlane.f32.xlu0 %v1106
        %v1124 = vpop.xlane.xlu0 %1123
        %1125 = vadd.xlane.f32.xlu0 %v1107
        %v1126 = vpop.xlane.xlu0 %1125
        %1127 = vadd.xlane.f32.xlu0 %v1108
        %v1128 = vpop.xlane.xlu0 %1127
        %1129 = vadd.xlane.f32.xlu0 %v1109
        %v1130 = vpop.xlane.xlu0 %1129
        %1131 = vadd.xlane.f32.xlu0 %v1110
        %v1132 = vpop.xlane.xlu0 %1131
        %1133 = vadd.xlane.f32.xlu0 %v1111
        %v1134 = vpop.xlane.xlu0 %1133
        %1135 = vadd.xlane.f32.xlu0 %v1112
        %v1136 = vpop.xlane.xlu0 %1135
        %1137 = vadd.xlane.f32.xlu0 %v1113
        %v1138 = vpop.xlane.xlu0 %1137
        %1139 = vadd.xlane.f32.xlu0 %v1114
        %v1140 = vpop.xlane.xlu0 %1139
        %1141 = vadd.xlane.f32.xlu0 %v1115
        %v1142 = vpop.xlane.xlu0 %1141
        %1143 = vadd.xlane.f32.xlu0 %v1116
        %v1144 = vpop.xlane.xlu0 %1143
        %1145 = vadd.xlane.f32.xlu0 %v1117
        %v1146 = vpop.xlane.xlu0 %1145
        %1147 = vadd.xlane.f32.xlu0 %v1118
        %v1148 = vpop.xlane.xlu0 %1147
        %1149 = vadd.xlane.f32.xlu0 %v1119
        %v1150 = vpop.xlane.xlu0 %1149
        %1151 = vadd.xlane.f32.xlu0 %v1120
        %v1152 = vpop.xlane.xlu0 %1151
        %v1153 = vadd.f32 %v1122, 1e-08
        %v1154 = vadd.f32 %v1124, 1e-08
        %v1155 = vadd.f32 %v1126, 1e-08
        %v1156 = vadd.f32 %v1128, 1e-08
        %v1157 = vadd.f32 %v1130, 1e-08
        %v1158 = vadd.f32 %v1132, 1e-08
        %v1159 = vadd.f32 %v1134, 1e-08
        %v1160 = vadd.f32 %v1136, 1e-08
        %v1161 = vadd.f32 %v1138, 1e-08
        %v1162 = vadd.f32 %v1140, 1e-08
        %v1163 = vadd.f32 %v1142, 1e-08
        %v1164 = vadd.f32 %v1144, 1e-08
        %v1165 = vadd.f32 %v1146, 1e-08
        %v1166 = vadd.f32 %v1148, 1e-08
        %v1167 = vadd.f32 %v1150, 1e-08
        %v1168 = vadd.f32 %v1152, 1e-08
        %v1169 = vrsqrt.pop %v1153
        %v1170 = vrsqrt.pop %v1154
        %v1171 = vrsqrt.pop %v1155
        %v1172 = vrsqrt.pop %v1156
        %v1173 = vrsqrt.pop %v1157
        %v1174 = vrsqrt.pop %v1158
        %v1175 = vrsqrt.pop %v1159
        %v1176 = vrsqrt.pop %v1160
        %v1177 = vrsqrt.pop %v1161
        %v1178 = vrsqrt.pop %v1162
        %v1179 = vrsqrt.pop %v1163
        %v1180 = vrsqrt.pop %v1164
        %v1181 = vrsqrt.pop %v1165
        %v1182 = vrsqrt.pop %v1166
        %v1183 = vrsqrt.pop %v1167
        %v1184 = vrsqrt.pop %v1168
        %v1185 = vmul.f32 %v1027, %v1169
        %v1186 = vmul.f32 %v1032, %v1170
        %v1187 = vmul.f32 %v1037, %v1171
        %v1188 = vmul.f32 %v1042, %v1172
        %v1189 = vmul.f32 %v1047, %v1173
        %v1190 = vmul.f32 %v1052, %v1174
        %v1191 = vmul.f32 %v1057, %v1175
        %v1192 = vmul.f32 %v1062, %v1176
        %v1193 = vmul.f32 %v1067, %v1177
        %v1194 = vmul.f32 %v1072, %v1178
        %v1195 = vmul.f32 %v1077, %v1179
        %v1196 = vmul.f32 %v1082, %v1180
        %v1197 = vmul.f32 %v1087, %v1181
        %v1198 = vmul.f32 %v1092, %v1182
        %v1199 = vmul.f32 %v1097, %v1183
        %v1200 = vmul.f32 %v1102, %v1184
        %v1201 = vmul.f32 %v1185, 0.1
        %v1202 = vmul.f32 %v1186, 0.1
        %v1203 = vmul.f32 %v1187, 0.1
        %v1204 = vmul.f32 %v1188, 0.1
        %v1205 = vmul.f32 %v1189, 0.1
        %v1206 = vmul.f32 %v1190, 0.1
        %v1207 = vmul.f32 %v1191, 0.1
        %v1208 = vmul.f32 %v1192, 0.1
        %v1209 = vmul.f32 %v1193, 0.1
        %v1210 = vmul.f32 %v1194, 0.1
        %v1211 = vmul.f32 %v1195, 0.1
        %v1212 = vmul.f32 %v1196, 0.1
        %v1213 = vmul.f32 %v1197, 0.1
        %v1214 = vmul.f32 %v1198, 0.1
        %v1215 = vmul.f32 %v1199, 0.1
        %v1216 = vmul.f32 %v1200, 0.1
        %v1217 = vpack.c.bf16 %v1202, %v1201
        %v1218 = vpack.c.bf16 %v1204, %v1203
        %v1219 = vpack.c.bf16 %v1206, %v1205
        %v1220 = vpack.c.bf16 %v1208, %v1207
        %v1221 = vpack.c.bf16 %v1210, %v1209
        %v1222 = vpack.c.bf16 %v1212, %v1211
        %v1223 = vpack.c.bf16 %v1214, %v1213
        %v1224 = vpack.c.bf16 %v1216, %v1215
        %v1225 = vpack.c.bf16 %v1186, %v1185
        %v1226 = vpack.c.bf16 %v1188, %v1187
        %v1227 = vpack.c.bf16 %v1190, %v1189
        %v1228 = vpack.c.bf16 %v1192, %v1191
        %v1229 = vpack.c.bf16 %v1194, %v1193
        %v1230 = vpack.c.bf16 %v1196, %v1195
        %v1231 = vpack.c.bf16 %v1198, %v1197
        %v1232 = vpack.c.bf16 %v1200, %v1199
        %1233 = vmatprep.subr.bf16.mxu0 0
        %1234 = vmatpush1.bf16.xpose.msra.mxu0 %v1225
        %1235 = vmatprep.subr.bf16.mxu0 0
        %1236 = vmatpush1.bf16.xpose.msra.mxu0 %v1226
        %1237 = vmatprep.subr.bf16.mxu0 0
        %1238 = vmatpush1.bf16.xpose.msra.mxu0 %v1227
        %1239 = vmatprep.subr.bf16.mxu0 0
        %1240 = vmatpush1.bf16.xpose.msra.mxu0 %v1228
        %1241 = vmatprep.subr.bf16.mxu0 0
        %1242 = vmatpush1.bf16.xpose.msra.mxu0 %v1229
        %1243 = vmatprep.subr.bf16.mxu0 0
        %1244 = vmatpush1.bf16.xpose.msra.mxu0 %v1230
        %1245 = vmatprep.subr.bf16.mxu0 0
        %1246 = vmatpush1.bf16.xpose.msra.mxu0 %v1231
        %1247 = vmatprep.subr.bf16.mxu0 0
        %1248 = vmatpush1.bf16.xpose.msra.mxu0 %v1232
        %1249 = vmatprep.subr.bf16.mxu0 0
        %1250 = vmatpush1.bf16.xpose.msra.mxu0 0
        %1251 = vmatprep.subr.bf16.mxu0 0
        %1252 = vmatpush1.bf16.xpose.msra.mxu0 0
        %1253 = vmatprep.subr.bf16.mxu0 0
        %1254 = vmatpush1.bf16.xpose.msra.mxu0 0
        %1255 = vmatprep.subr.bf16.mxu0 0
        %1256 = vmatpush1.bf16.xpose.msra.mxu0 0
        %1257 = vmatprep.subr.bf16.mxu0 0
        %1258 = vmatpush1.bf16.xpose.msra.mxu0 0
        %1259 = vmatprep.subr.bf16.mxu0 0
        %1260 = vmatpush1.bf16.xpose.msra.mxu0 0
        %1261 = vmatprep.subr.bf16.mxu0 0
        %1262 = vmatpush1.bf16.xpose.msra.mxu0 0
        %1263 = vmatprep.subr.bf16.mxu0 0
        %1264 = vmatpush1.bf16.xpose.msra.mxu0 0
        %1265 = vmatprep.mubr.bf16.mxu0 0
        %1266 = vmatmul.mubr.bf16.gmra.mrb[0].mxu0 %v1217
        %v1267 = vpop.f32.mrb[0].mxu0
        %v1268 = vadd.f32 0.0, %v1267
        %v1269 = vpop.f32.mrb[0].mxu0
        %v1270 = vpop.f32.mrb[0].mxu0
        %v1271 = vadd.f32 0.0, %v1270
        %v1272 = vpop.f32.mrb[0].mxu0
        %1273 = vmatprep.mubr.bf16.mxu0 0
        %1274 = vmatmul.mubr.bf16.gmra.mrb[0].mxu0 %v1218
        %v1275 = vpop.f32.mrb[0].mxu0
        %v1276 = vadd.f32 0.0, %v1275
        %v1277 = vpop.f32.mrb[0].mxu0
        %v1278 = vpop.f32.mrb[0].mxu0
        %v1279 = vadd.f32 0.0, %v1278
        %v1280 = vpop.f32.mrb[0].mxu0
        %1281 = vmatprep.mubr.bf16.mxu0 0
        %1282 = vmatmul.mubr.bf16.gmra.mrb[0].mxu0 %v1219
        %v1283 = vpop.f32.mrb[0].mxu0
        %v1284 = vadd.f32 0.0, %v1283
        %v1285 = vpop.f32.mrb[0].mxu0
        %v1286 = vpop.f32.mrb[0].mxu0
        %v1287 = vadd.f32 0.0, %v1286
        %v1288 = vpop.f32.mrb[0].mxu0
        %1289 = vmatprep.mubr.bf16.mxu0 0
        %1290 = vmatmul.mubr.bf16.gmra.mrb[0].mxu0 %v1220
        %v1291 = vpop.f32.mrb[0].mxu0
        %v1292 = vadd.f32 0.0, %v1291
        %v1293 = vpop.f32.mrb[0].mxu0
        %v1294 = vpop.f32.mrb[0].mxu0
        %v1295 = vadd.f32 0.0, %v1294
        %v1296 = vpop.f32.mrb[0].mxu0
        %1297 = vmatprep.mubr.bf16.mxu0 0
        %1298 = vmatmul.mubr.bf16.gmra.mrb[0].mxu0 %v1221
        %v1299 = vpop.f32.mrb[0].mxu0
        %v1300 = vadd.f32 0.0, %v1299
        %v1301 = vpop.f32.mrb[0].mxu0
        %v1302 = vpop.f32.mrb[0].mxu0
        %v1303 = vadd.f32 0.0, %v1302
        %v1304 = vpop.f32.mrb[0].mxu0
        %1305 = vmatprep.mubr.bf16.mxu0 0
        %1306 = vmatmul.mubr.bf16.gmra.mrb[0].mxu0 %v1222
        %v1307 = vpop.f32.mrb[0].mxu0
        %v1308 = vadd.f32 0.0, %v1307
        %v1309 = vpop.f32.mrb[0].mxu0
        %v1310 = vpop.f32.mrb[0].mxu0
        %v1311 = vadd.f32 0.0, %v1310
        %v1312 = vpop.f32.mrb[0].mxu0
        %1313 = vmatprep.mubr.bf16.mxu0 0
        %1314 = vmatmul.mubr.bf16.gmra.mrb[0].mxu0 %v1223
        %v1315 = vpop.f32.mrb[0].mxu0
        %v1316 = vadd.f32 0.0, %v1315
        %v1317 = vpop.f32.mrb[0].mxu0
        %v1318 = vpop.f32.mrb[0].mxu0
        %v1319 = vadd.f32 0.0, %v1318
        %v1320 = vpop.f32.mrb[0].mxu0
        %1321 = vmatprep.mubr.bf16.mxu0 0
        %1322 = vmatmul.mubr.bf16.gmra.mrb[0].mxu0 %v1224
        %v1323 = vpop.f32.mrb[0].mxu0
        %v1324 = vadd.f32 0.0, %v1323
        %v1325 = vpop.f32.mrb[0].mxu0
        %v1326 = vpop.f32.mrb[0].mxu0
        %v1327 = vadd.f32 0.0, %v1326
        %v1328 = vpop.f32.mrb[0].mxu0
        %1329 = vdwg.mxu0
        %v1330 = vtanh.pop %v1268
        %v1331 = vtanh.pop %v1271
        %v1332 = vtanh.pop %v1276
        %v1333 = vtanh.pop %v1279
        %v1334 = vtanh.pop %v1284
        %v1335 = vtanh.pop %v1287
        %v1336 = vtanh.pop %v1292
        %v1337 = vtanh.pop %v1295
        %v1338 = vtanh.pop %v1300
        %v1339 = vtanh.pop %v1303
        %v1340 = vtanh.pop %v1308
        %v1341 = vtanh.pop %v1311
        %v1342 = vtanh.pop %v1316
        %v1343 = vtanh.pop %v1319
        %v1344 = vtanh.pop %v1324
        %v1345 = vtanh.pop %v1327
        %v1346 = vmul.f32 %v1330, 0.5
        %v1347 = vmul.f32 %v1331, 0.5
        %v1348 = vmul.f32 %v1332, 0.5
        %v1349 = vmul.f32 %v1333, 0.5
        %v1350 = vmul.f32 %v1334, 0.5
        %v1351 = vmul.f32 %v1335, 0.5
        %v1352 = vmul.f32 %v1336, 0.5
        %v1353 = vmul.f32 %v1337, 0.5
        %v1354 = vmul.f32 %v1338, 0.5
        %v1355 = vmul.f32 %v1339, 0.5
        %v1356 = vmul.f32 %v1340, 0.5
        %v1357 = vmul.f32 %v1341, 0.5
        %v1358 = vmul.f32 %v1342, 0.5
        %v1359 = vmul.f32 %v1343, 0.5
        %v1360 = vmul.f32 %v1344, 0.5
        %v1361 = vmul.f32 %v1345, 0.5
        %v1362 = vadd.f32 %v1346, 0.5
        %v1363 = vadd.f32 %v1347, 0.5
        %v1364 = vadd.f32 %v1348, 0.5
        %v1365 = vadd.f32 %v1349, 0.5
        %v1366 = vadd.f32 %v1350, 0.5
        %v1367 = vadd.f32 %v1351, 0.5
        %v1368 = vadd.f32 %v1352, 0.5
        %v1369 = vadd.f32 %v1353, 0.5
        %v1370 = vadd.f32 %v1354, 0.5
        %v1371 = vadd.f32 %v1355, 0.5
        %v1372 = vadd.f32 %v1356, 0.5
        %v1373 = vadd.f32 %v1357, 0.5
        %v1374 = vadd.f32 %v1358, 0.5
        %v1375 = vadd.f32 %v1359, 0.5
        %v1376 = vadd.f32 %v1360, 0.5
        %v1377 = vadd.f32 %v1361, 0.5
        %v1378 = vmul.f32 %v1362, %v823
        %v1379 = vmul.f32 %v1363, %v824
        %v1380 = vmul.f32 %v1364, %v825
        %v1381 = vmul.f32 %v1365, %v826
        %v1382 = vmul.f32 %v1366, %v827
        %v1383 = vmul.f32 %v1367, %v828
        %v1384 = vmul.f32 %v1368, %v829
        %v1385 = vmul.f32 %v1369, %v830
        %v1386 = vmul.f32 %v1370, %v831
        %v1387 = vmul.f32 %v1371, %v832
        %v1388 = vmul.f32 %v1372, %v833
        %v1389 = vmul.f32 %v1373, %v834
        %v1390 = vmul.f32 %v1374, %v835
        %v1391 = vmul.f32 %v1375, %v836
        %v1392 = vmul.f32 %v1376, %v837
        %v1393 = vmul.f32 %v1377, %v838
        %1394 = vadd.xlane.f32.xlu0 %v1378
        %v1395 = vpop.xlane.xlu0 %1394
        %1396 = vadd.xlane.f32.xlu0 %v1379
        %v1397 = vpop.xlane.xlu0 %1396
        %1398 = vadd.xlane.f32.xlu0 %v1380
        %v1399 = vpop.xlane.xlu0 %1398
        %1400 = vadd.xlane.f32.xlu0 %v1381
        %v1401 = vpop.xlane.xlu0 %1400
        %1402 = vadd.xlane.f32.xlu0 %v1382
        %v1403 = vpop.xlane.xlu0 %1402
        %1404 = vadd.xlane.f32.xlu0 %v1383
        %v1405 = vpop.xlane.xlu0 %1404
        %1406 = vadd.xlane.f32.xlu0 %v1384
        %v1407 = vpop.xlane.xlu0 %1406
        %1408 = vadd.xlane.f32.xlu0 %v1385
        %v1409 = vpop.xlane.xlu0 %1408
        %1410 = vadd.xlane.f32.xlu0 %v1386
        %v1411 = vpop.xlane.xlu0 %1410
        %1412 = vadd.xlane.f32.xlu0 %v1387
        %v1413 = vpop.xlane.xlu0 %1412
        %1414 = vadd.xlane.f32.xlu0 %v1388
        %v1415 = vpop.xlane.xlu0 %1414
        %1416 = vadd.xlane.f32.xlu0 %v1389
        %v1417 = vpop.xlane.xlu0 %1416
        %1418 = vadd.xlane.f32.xlu0 %v1390
        %v1419 = vpop.xlane.xlu0 %1418
        %1420 = vadd.xlane.f32.xlu0 %v1391
        %v1421 = vpop.xlane.xlu0 %1420
        %1422 = vadd.xlane.f32.xlu0 %v1392
        %v1423 = vpop.xlane.xlu0 %1422
        %1424 = vadd.xlane.f32.xlu0 %v1393
        %v1425 = vpop.xlane.xlu0 %1424
        %v1426 = vadd.f32 %v1395, 1e-08
        %v1427 = vadd.f32 %v1397, 1e-08
        %v1428 = vadd.f32 %v1399, 1e-08
        %v1429 = vadd.f32 %v1401, 1e-08
        %v1430 = vadd.f32 %v1403, 1e-08
        %v1431 = vadd.f32 %v1405, 1e-08
        %v1432 = vadd.f32 %v1407, 1e-08
        %v1433 = vadd.f32 %v1409, 1e-08
        %v1434 = vadd.f32 %v1411, 1e-08
        %v1435 = vadd.f32 %v1413, 1e-08
        %v1436 = vadd.f32 %v1415, 1e-08
        %v1437 = vadd.f32 %v1417, 1e-08
        %v1438 = vadd.f32 %v1419, 1e-08
        %v1439 = vadd.f32 %v1421, 1e-08
        %v1440 = vadd.f32 %v1423, 1e-08
        %v1441 = vadd.f32 %v1425, 1e-08
        %v1442 = vrcp.pop %v1426
        %v1443 = vrcp.pop %v1427
        %v1444 = vrcp.pop %v1428
        %v1445 = vrcp.pop %v1429
        %v1446 = vrcp.pop %v1430
        %v1447 = vrcp.pop %v1431
        %v1448 = vrcp.pop %v1432
        %v1449 = vrcp.pop %v1433
        %v1450 = vrcp.pop %v1434
        %v1451 = vrcp.pop %v1435
        %v1452 = vrcp.pop %v1436
        %v1453 = vrcp.pop %v1437
        %v1454 = vrcp.pop %v1438
        %v1455 = vrcp.pop %v1439
        %v1456 = vrcp.pop %v1440
        %v1457 = vrcp.pop %v1441
        %v1458 = vmul.f32 %v1378, %v1442
        %v1459 = vmul.f32 %v1379, %v1443
        %v1460 = vmul.f32 %v1380, %v1444
        %v1461 = vmul.f32 %v1381, %v1445
        %v1462 = vmul.f32 %v1382, %v1446
        %v1463 = vmul.f32 %v1383, %v1447
        %v1464 = vmul.f32 %v1384, %v1448
        %v1465 = vmul.f32 %v1385, %v1449
        %v1466 = vmul.f32 %v1386, %v1450
        %v1467 = vmul.f32 %v1387, %v1451
        %v1468 = vmul.f32 %v1388, %v1452
        %v1469 = vmul.f32 %v1389, %v1453
        %v1470 = vmul.f32 %v1390, %v1454
        %v1471 = vmul.f32 %v1391, %v1455
        %v1472 = vmul.f32 %v1392, %v1456
        %v1473 = vmul.f32 %v1393, %v1457
        %v1474 = vadd.f32 %v919, %v1458
        %v1475 = vadd.f32 %v920, %v1459
        %v1476 = vadd.f32 %v921, %v1460
        %v1477 = vadd.f32 %v922, %v1461
        %v1478 = vadd.f32 %v923, %v1462
        %v1479 = vadd.f32 %v924, %v1463
        %v1480 = vadd.f32 %v925, %v1464
        %v1481 = vadd.f32 %v926, %v1465
        %v1482 = vadd.f32 %v927, %v1466
        %v1483 = vadd.f32 %v928, %v1467
        %v1484 = vadd.f32 %v929, %v1468
        %v1485 = vadd.f32 %v930, %v1469
        %v1486 = vadd.f32 %v931, %v1470
        %v1487 = vadd.f32 %v932, %v1471
        %v1488 = vadd.f32 %v933, %v1472
        %v1489 = vadd.f32 %v934, %v1473
        %v1490 = vpack.c.bf16 %v1475, %v1474
        %v1491 = vpack.c.bf16 %v1477, %v1476
        %v1492 = vpack.c.bf16 %v1479, %v1478
        %v1493 = vpack.c.bf16 %v1481, %v1480
        %v1494 = vpack.c.bf16 %v1483, %v1482
        %v1495 = vpack.c.bf16 %v1485, %v1484
        %v1496 = vpack.c.bf16 %v1487, %v1486
        %v1497 = vpack.c.bf16 %v1489, %v1488
        %1498 = vmatprep.subr.bf16.mxu0 0
        %1499 = vmatpush1.bf16.msra.mxu0 %v358
        %1500 = vmatprep.subr.bf16.mxu0 0
        %1501 = vmatpush1.bf16.msra.mxu0 %v359
        %1502 = vmatprep.subr.bf16.mxu0 0
        %1503 = vmatpush1.bf16.msra.mxu0 %v360
        %1504 = vmatprep.subr.bf16.mxu0 0
        %1505 = vmatpush1.bf16.msra.mxu0 %v361
        %1506 = vmatprep.subr.bf16.mxu0 0
        %1507 = vmatpush1.bf16.msra.mxu0 %v362
        %1508 = vmatprep.subr.bf16.mxu0 0
        %1509 = vmatpush1.bf16.msra.mxu0 %v363
        %1510 = vmatprep.subr.bf16.mxu0 0
        %1511 = vmatpush1.bf16.msra.mxu0 %v364
        %1512 = vmatprep.subr.bf16.mxu0 0
        %1513 = vmatpush1.bf16.msra.mxu0 %v365
        %1514 = vmatprep.subr.bf16.mxu0 0
        %1515 = vmatpush1.bf16.msra.mxu0 0
        %1516 = vmatprep.subr.bf16.mxu0 0
        %1517 = vmatpush1.bf16.msra.mxu0 0
        %1518 = vmatprep.subr.bf16.mxu0 0
        %1519 = vmatpush1.bf16.msra.mxu0 0
        %1520 = vmatprep.subr.bf16.mxu0 0
        %1521 = vmatpush1.bf16.msra.mxu0 0
        %1522 = vmatprep.subr.bf16.mxu0 0
        %1523 = vmatpush1.bf16.msra.mxu0 0
        %1524 = vmatprep.subr.bf16.mxu0 0
        %1525 = vmatpush1.bf16.msra.mxu0 0
        %1526 = vmatprep.subr.bf16.mxu0 0
        %1527 = vmatpush1.bf16.msra.mxu0 0
        %1528 = vmatprep.subr.bf16.mxu0 0
        %1529 = vmatpush1.bf16.msra.mxu0 0
        %1530 = vmatprep.mubr.bf16.mxu0 0
        %1531 = vmatmul.mubr.bf16.gmra.mrb[0].mxu0 %v1490
        %v1532 = vpop.f32.mrb[0].mxu0
        %v1533 = vadd.f32 0.0, %v1532
        %v1534 = vpop.f32.mrb[0].mxu0
        %v1535 = vpop.f32.mrb[0].mxu0
        %v1536 = vadd.f32 0.0, %v1535
        %v1537 = vpop.f32.mrb[0].mxu0
        %1538 = vmatprep.mubr.bf16.mxu0 0
        %1539 = vmatmul.mubr.bf16.gmra.mrb[0].mxu0 %v1491
        %v1540 = vpop.f32.mrb[0].mxu0
        %v1541 = vadd.f32 0.0, %v1540
        %v1542 = vpop.f32.mrb[0].mxu0
        %v1543 = vpop.f32.mrb[0].mxu0
        %v1544 = vadd.f32 0.0, %v1543
        %v1545 = vpop.f32.mrb[0].mxu0
        %1546 = vmatprep.mubr.bf16.mxu0 0
        %1547 = vmatmul.mubr.bf16.gmra.mrb[0].mxu0 %v1492
        %v1548 = vpop.f32.mrb[0].mxu0
        %v1549 = vadd.f32 0.0, %v1548
        %v1550 = vpop.f32.mrb[0].mxu0
        %v1551 = vpop.f32.mrb[0].mxu0
        %v1552 = vadd.f32 0.0, %v1551
        %v1553 = vpop.f32.mrb[0].mxu0
        %1554 = vmatprep.mubr.bf16.mxu0 0
        %1555 = vmatmul.mubr.bf16.gmra.mrb[0].mxu0 %v1493
        %v1556 = vpop.f32.mrb[0].mxu0
        %v1557 = vadd.f32 0.0, %v1556
        %v1558 = vpop.f32.mrb[0].mxu0
        %v1559 = vpop.f32.mrb[0].mxu0
        %v1560 = vadd.f32 0.0, %v1559
        %v1561 = vpop.f32.mrb[0].mxu0
        %1562 = vmatprep.mubr.bf16.mxu0 0
        %1563 = vmatmul.mubr.bf16.gmra.mrb[0].mxu0 %v1494
        %v1564 = vpop.f32.mrb[0].mxu0
        %v1565 = vadd.f32 0.0, %v1564
        %v1566 = vpop.f32.mrb[0].mxu0
        %v1567 = vpop.f32.mrb[0].mxu0
        %v1568 = vadd.f32 0.0, %v1567
        %v1569 = vpop.f32.mrb[0].mxu0
        %1570 = vmatprep.mubr.bf16.mxu0 0
        %1571 = vmatmul.mubr.bf16.gmra.mrb[0].mxu0 %v1495
        %v1572 = vpop.f32.mrb[0].mxu0
        %v1573 = vadd.f32 0.0, %v1572
        %v1574 = vpop.f32.mrb[0].mxu0
        %v1575 = vpop.f32.mrb[0].mxu0
        %v1576 = vadd.f32 0.0, %v1575
        %v1577 = vpop.f32.mrb[0].mxu0
        %1578 = vmatprep.mubr.bf16.mxu0 0
        %1579 = vmatmul.mubr.bf16.gmra.mrb[0].mxu0 %v1496
        %v1580 = vpop.f32.mrb[0].mxu0
        %v1581 = vadd.f32 0.0, %v1580
        %v1582 = vpop.f32.mrb[0].mxu0
        %v1583 = vpop.f32.mrb[0].mxu0
        %v1584 = vadd.f32 0.0, %v1583
        %v1585 = vpop.f32.mrb[0].mxu0
        %1586 = vmatprep.mubr.bf16.mxu0 0
        %1587 = vmatmul.mubr.bf16.gmra.mrb[0].mxu0 %v1497
        %v1588 = vpop.f32.mrb[0].mxu0
        %v1589 = vadd.f32 0.0, %v1588
        %v1590 = vpop.f32.mrb[0].mxu0
        %v1591 = vpop.f32.mrb[0].mxu0
        %v1592 = vadd.f32 0.0, %v1591
        %v1593 = vpop.f32.mrb[0].mxu0
        %1594 = vdwg.mxu0
        %v1595 = vld [vmem:[#allocation3] sm:$0xff]
        %v1596 = vld [vmem:[#allocation3 + $0x8] sm:$0xff]
        %v1597 = vld [vmem:[#allocation3 + $0x10] sm:$0xff]
        %v1598 = vld [vmem:[#allocation3 + $0x18] sm:$0xff]
        %v1599 = vld [vmem:[#allocation3 + $0x20] sm:$0xff]
        %v1600 = vld [vmem:[#allocation3 + $0x28] sm:$0xff]
        %v1601 = vld [vmem:[#allocation3 + $0x30] sm:$0xff]
        %v1602 = vld [vmem:[#allocation3 + $0x38] sm:$0xff]
        %v1603 = vld [vmem:[#allocation3 + $0x40] sm:$0xff]
        %v1604 = vld [vmem:[#allocation3 + $0x48] sm:$0xff]
        %v1605 = vld [vmem:[#allocation3 + $0x50] sm:$0xff]
        %v1606 = vld [vmem:[#allocation3 + $0x58] sm:$0xff]
        %v1607 = vld [vmem:[#allocation3 + $0x60] sm:$0xff]
        %v1608 = vld [vmem:[#allocation3 + $0x68] sm:$0xff]
        %v1609 = vld [vmem:[#allocation3 + $0x70] sm:$0xff]
        %v1610 = vld [vmem:[#allocation3 + $0x78] sm:$0xff]
        %v1611 = vmul.f32 %v1533, 0.25
        %v1612 = vmul.f32 %v1536, 0.25
        %v1613 = vmul.f32 %v1541, 0.25
        %v1614 = vmul.f32 %v1544, 0.25
        %v1615 = vmul.f32 %v1549, 0.25
        %v1616 = vmul.f32 %v1552, 0.25
        %v1617 = vmul.f32 %v1557, 0.25
        %v1618 = vmul.f32 %v1560, 0.25
        %v1619 = vmul.f32 %v1565, 0.25
        %v1620 = vmul.f32 %v1568, 0.25
        %v1621 = vmul.f32 %v1573, 0.25
        %v1622 = vmul.f32 %v1576, 0.25
        %v1623 = vmul.f32 %v1581, 0.25
        %v1624 = vmul.f32 %v1584, 0.25
        %v1625 = vmul.f32 %v1589, 0.25
        %v1626 = vmul.f32 %v1592, 0.25
        %v1627 = vadd.f32 %v1595, %v1611
        %v1628 = vadd.f32 %v1596, %v1612
        %v1629 = vadd.f32 %v1597, %v1613
        %v1630 = vadd.f32 %v1598, %v1614
        %v1631 = vadd.f32 %v1599, %v1615
        %v1632 = vadd.f32 %v1600, %v1616
        %v1633 = vadd.f32 %v1601, %v1617
        %v1634 = vadd.f32 %v1602, %v1618
        %v1635 = vadd.f32 %v1603, %v1619
        %v1636 = vadd.f32 %v1604, %v1620
        %v1637 = vadd.f32 %v1605, %v1621
        %v1638 = vadd.f32 %v1606, %v1622
        %v1639 = vadd.f32 %v1607, %v1623
        %v1640 = vadd.f32 %v1608, %v1624
        %v1641 = vadd.f32 %v1609, %v1625
        %v1642 = vadd.f32 %v1610, %v1626
        %1643 = vst [vmem:[#allocation2] sm:$0xff] %v1627
        %1644 = vst [vmem:[#allocation2 + $0x8] sm:$0xff] %v1628
        %1645 = vst [vmem:[#allocation2 + $0x10] sm:$0xff] %v1629
        %1646 = vst [vmem:[#allocation2 + $0x18] sm:$0xff] %v1630
        %1647 = vst [vmem:[#allocation2 + $0x20] sm:$0xff] %v1631
        %1648 = vst [vmem:[#allocation2 + $0x28] sm:$0xff] %v1632
        %1649 = vst [vmem:[#allocation2 + $0x30] sm:$0xff] %v1633
        %1650 = vst [vmem:[#allocation2 + $0x38] sm:$0xff] %v1634
        %1651 = vst [vmem:[#allocation2 + $0x40] sm:$0xff] %v1635
        %1652 = vst [vmem:[#allocation2 + $0x48] sm:$0xff] %v1636
        %1653 = vst [vmem:[#allocation2 + $0x50] sm:$0xff] %v1637
        %1654 = vst [vmem:[#allocation2 + $0x58] sm:$0xff] %v1638
        %1655 = vst [vmem:[#allocation2 + $0x60] sm:$0xff] %v1639
        %1656 = vst [vmem:[#allocation2 + $0x68] sm:$0xff] %v1640
        %1657 = vst [vmem:[#allocation2 + $0x70] sm:$0xff] %v1641
        %1658 = vst [vmem:[#allocation2 + $0x78] sm:$0xff] %v1642
        %p1659 = scmp.eq.s32.totalorder %s20, 3
        // Predicated region
        $region53: #{tpu_custom_call.1} parent=35 // pred_check
          %p1660 = pneg %p1659
        $region54: #{tpu_custom_call.1} parent=35 // pred_check_branch
          %1662 = sbr.rel (%p1660) target = $region56
        $region55: #{tpu_custom_call.1} parent=35 // pred_region
          %1663 = vst [vmem:[#allocation10] sm:$0xff] %v1627
          %1664 = vst [vmem:[#allocation10 + $0x8] sm:$0xff] %v1628
          %1665 = vst [vmem:[#allocation10 + $0x10] sm:$0xff] %v1629
          %1666 = vst [vmem:[#allocation10 + $0x18] sm:$0xff] %v1630
          %1667 = vst [vmem:[#allocation10 + $0x20] sm:$0xff] %v1631
          %1668 = vst [vmem:[#allocation10 + $0x28] sm:$0xff] %v1632
          %1669 = vst [vmem:[#allocation10 + $0x30] sm:$0xff] %v1633
          %1670 = vst [vmem:[#allocation10 + $0x38] sm:$0xff] %v1634
          %1671 = vst [vmem:[#allocation10 + $0x40] sm:$0xff] %v1635
          %1672 = vst [vmem:[#allocation10 + $0x48] sm:$0xff] %v1636
          %1673 = vst [vmem:[#allocation10 + $0x50] sm:$0xff] %v1637
          %1674 = vst [vmem:[#allocation10 + $0x58] sm:$0xff] %v1638
          %1675 = vst [vmem:[#allocation10 + $0x60] sm:$0xff] %v1639
          %1676 = vst [vmem:[#allocation10 + $0x68] sm:$0xff] %v1640
          %1677 = vst [vmem:[#allocation10 + $0x70] sm:$0xff] %v1641
          %1678 = vst [vmem:[#allocation10 + $0x78] sm:$0xff] %v1642
        $region56: #{tpu_custom_call.1} parent=35 // pred_fallthru
          _
        // Predicated region
        $region57: #{tpu_custom_call.1} parent=35 // pred_check
          %p1679 = pneg %p132
        $region58: #{tpu_custom_call.1} parent=35 // pred_check_branch
          %1681 = sbr.rel (%p1679) target = $region60
        $region59: #{tpu_custom_call.1} parent=35 // pred_region
          %s1683 = ssub.s32 2048, 2048
          %1684 = vsyncadd [#allocation6], %s1683
          %s1685 = sshll.u32 [#allocation10], 4
          %s1686 = int_to_ptr.vmem [resolvable:$true] %s1685
          %1691 = dma.vmem_to_hbm [thread:$0]  %s1686, 2048, %s4, [#allocation6], 128, 128, 8
        $region60: #{tpu_custom_call.1} parent=35 // pred_fallthru
          _
        // Predicated region
        $region61: #{tpu_custom_call.1} parent=35 // pred_check
          %p1692 = pneg %p132
        $region62: #{tpu_custom_call.1} parent=35 // pred_check_branch
          %1694 = sbr.rel (%p1692) target = $region64
        $region63: #{tpu_custom_call.1} parent=35 // pred_region
          %1695 = dma.done [#allocation6], 2048
        $region64: #{tpu_custom_call.1} parent=35 // pred_fallthru
          _
      $region36: #{tpu_custom_call.1} parent=5 // pred_fallthru
        _
      %p1696 = scmp.le.s32.totalorder 2, %s15
      // Predicated region
      $region65: #{tpu_custom_call.1} parent=5 // pred_check
        %p1697 = pneg %p1696
      $region66: #{tpu_custom_call.1} parent=5 // pred_check_branch
        %1699 = sbr.rel (%p1697) target = $region68
      $region67: #{tpu_custom_call.1} parent=5 // pred_region
        %s1700 = ssub.s32 %s15, 2
      $region68: #{tpu_custom_call.1} parent=5 // pred_fallthru
        _
    $region6: #{tpu_custom_call.1} parent=1 // loop_footer
      %s19 = sadd.s32 1, %s15
    $region7: #{tpu_custom_call.1} parent=1 // loop_footer_branch
      %14 = sbr.rel target = $region3
    $region8: #{tpu_custom_call.1} parent=1 // loop_exit
      _
    %1701 = vsyncpa [#allocation5], 1
    %s1702 = scalar_lea.sflag [#allocation5], 1
    %1703 = vsyncpa %s1702, 1
    %1704 = vsyncpa [#allocation8], 1
    %s1705 = scalar_lea.sflag [#allocation8], 1
    %1706 = vsyncpa %s1705, 1
    %1707 = vsyncpa [#allocation6], 1
    %s1708 = scalar_lea.sflag [#allocation6], 1
    %1709 = vsyncpa %s1708, 1

</llo_original>
